<compile_context>
chip_gen: v7x
topology: tpu7x:2x2x1
jax: 0.10.0
libtpu: 0.0.40
codegen_flags: <defaults>
</compile_context>

<pallas_src>
import functools

import jax
import jax.numpy as jnp
from jax import lax
from jax.experimental import pallas as pl
from jax.experimental.pallas import tpu as pltpu

# ---------------------------------------------------------------------------
# Problem sizes (params.M of the original module)
# ---------------------------------------------------------------------------
M = 32        # params.M  (input dim == GRU hidden dim == classifier dim)
H = M         # GRU hidden size
E = 2 * M     # embedding output dim
B = 2         # batch
T = 8         # sequence length


# ---------------------------------------------------------------------------
# Pallas kernel
# ---------------------------------------------------------------------------
def mmaid_kernel(T, B, M, H,
                 x_ref,                 # (T*B, M)   time-major rows: row = t*B + b
                 we_ref, be_ref,        # (M, 2M), (1, 2M)
                 wi_ref, bi_ref,        # (2M, 3H), (1, 3H)   fused input gates [r|z|n]
                 wh_ref, bhn_ref,       # (H, 3H), (1, H)     fused hidden gates [r|z|n]
                 wc_ref, bc_ref,        # (H, M), (1, M)
                 out_ref):              # (T*B, M)   time-major rows
    f32 = jnp.float32

    # ---- Hoisted, sequence-parallel work (3 big matmuls, off the serial chain)
    x = x_ref[...]                                                   # (T*B, M)
    emb = jnp.maximum(
        jnp.dot(x, we_ref[...], preferred_element_type=f32) + be_ref[...], 0.0)
    # Dropout(0.1) is identity in eval mode.
    # Input-side gate pre-activations for all timesteps, with b_ir+b_hr,
    # b_iz+b_hz and b_in already folded into bi.
    gi = jnp.dot(emb, wi_ref[...], preferred_element_type=f32) + bi_ref[...]   # (T*B, 3H)

    wh = wh_ref[...]                                                 # (H, 3H)
    bhn = jnp.broadcast_to(bhn_ref[...], (B, H))                     # hoisted broadcast

    # ---- Serial GRU recurrence, fully unrolled (one matmul per step)
    h = jnp.zeros((B, H), f32)
    hs = []
    for t in range(T):
        # Contiguous static slice of the B rows for timestep t (time-major),
        # depends only on gi -> off the latency-critical h-chain.
        gi_t = gi[t * B:(t + 1) * B, :]                              # (B, 3H)

        gh = jnp.dot(h, wh, preferred_element_type=f32)              # (B, 3H)

        # Fused r/z sigmoid on the contiguous (B, 2H) slab: one EUP push.
        rz = jax.nn.sigmoid(gi_t[:, :2 * H] + gh[:, :2 * H])
        r = rz[:, :H]
        z = rz[:, H:2 * H]
        n = jnp.tanh(gi_t[:, 2 * H:3 * H] + r * (gh[:, 2 * H:3 * H] + bhn))
        h = n + z * (h - n)                                          # (B, H)
        hs.append(h)

    # ---- One contiguous time-major stack + one classifier matmul + one store.
    hs_tm = jnp.concatenate(hs, axis=0)                              # (T*B, H)
    out = jnp.dot(hs_tm, wc_ref[...], preferred_element_type=f32) + bc_ref[...]
    out_ref[...] = out


# ---------------------------------------------------------------------------
# Parameter fusion (done once, outside the kernel / forward)
# ---------------------------------------------------------------------------
def prepare_params(p):
    """Fuse GRU gate weights and fold paired biases (PyTorch order r, z, n)."""
    wi = jnp.concatenate([p["wir"], p["wiz"], p["win"]], axis=1)             # (2M, 3H)
    bi = jnp.concatenate([p["bir"] + p["bhr"],
                          p["biz"] + p["bhz"],
                          p["bin"]], axis=1)                                 # (1, 3H)
    wh = jnp.concatenate([p["whr"], p["whz"], p["whn"]], axis=1)             # (H, 3H)
    return dict(we=p["we"], be=p["be"],
                wi=wi, bi=bi,
                wh=wh, bhn=p["bhn"],
                wc=p["wc"], bc=p["bc"])


# ---------------------------------------------------------------------------
# Wrapper (only the tiny time-major transpose + free reshapes)
# ---------------------------------------------------------------------------
@jax.jit
def mmaid_forward(x_btm, fp):
    """x_btm: (B, T, M) float32, batch_first like the PyTorch module."""
    Bx, Tx, Mx = x_btm.shape
    # Time-major rows (row = t*B + b): transpose is 2 KB, handled by XLA.
    x_tm = jnp.transpose(x_btm, (1, 0, 2)).reshape(Tx * Bx, Mx)

    args = (x_tm,
            fp["we"], fp["be"],
            fp["wi"], fp["bi"],
            fp["wh"], fp["bhn"],
            fp["wc"], fp["bc"])

    out_tm = pl.pallas_call(
        functools.partial(mmaid_kernel, Tx, Bx, Mx, Mx),
        out_shape=jax.ShapeDtypeStruct((Tx * Bx, Mx), jnp.float32),
        in_specs=[pl.BlockSpec(memory_space=pltpu.MemorySpace.VMEM)] * len(args),
        out_specs=pl.BlockSpec(memory_space=pltpu.MemorySpace.VMEM),
    )(*args)

    # Back to batch-first (B, T, M).
    return jnp.transpose(out_tm.reshape(Tx, Bx, Mx), (1, 0, 2))


# ---------------------------------------------------------------------------
# Deterministic parameter init (PyTorch-style uniform(-k, k))
# ---------------------------------------------------------------------------
def init_params(key):
    ks = jax.random.split(key, 16)
    u = lambda k, shape, bound: jax.random.uniform(
        k, shape, jnp.float32, minval=-bound, maxval=bound)

    k_emb = 1.0 / jnp.sqrt(M)
    k_gru = 1.0 / jnp.sqrt(H)
    k_cls = 1.0 / jnp.sqrt(M)

    return dict(
        we=u(ks[0], (M, E), k_emb),  be=u(ks[1], (1, E), k_emb),
        wir=u(ks[2], (E, H), k_gru), wiz=u(ks[3], (E, H), k_gru),
        win=u(ks[4], (E, H), k_gru),
        bir=u(ks[5], (1, H), k_gru), biz=u(ks[6], (1, H), k_gru),
        bin=u(ks[7], (1, H), k_gru),
        whr=u(ks[8], (H, H), k_gru), whz=u(ks[9], (H, H), k_gru),
        whn=u(ks[10], (H, H), k_gru),
        bhr=u(ks[11], (1, H), k_gru), bhz=u(ks[12], (1, H), k_gru),
        bhn=u(ks[13], (1, H), k_gru),
        wc=u(ks[14], (H, M), k_cls), bc=u(ks[15], (1, M), k_cls),
    )


# ---------------------------------------------------------------------------
# Pure-JAX reference (unfused params, same math) for a correctness check
# ---------------------------------------------------------------------------
def mmaid_reference(x_btm, p):
    emb = jnp.maximum(x_btm @ p["we"] + p["be"], 0.0)          # (B, T, 2M)

    def step(h, e_t):
        gr = e_t @ p["wir"] + p["bir"]
        gz = e_t @ p["wiz"] + p["biz"]
        gn = e_t @ p["win"] + p["bin"]
        hr = h @ p["whr"] + p["bhr"]
        hz = h @ p["whz"] + p["bhz"]
        hn = h @ p["whn"] + p["bhn"]
        r = jax.nn.sigmoid(gr + hr)
        z = jax.nn.sigmoid(gz + hz)
        n = jnp.tanh(gn + r * hn)
        h_new = (1.0 - z) * n + z * h
        return h_new, h_new

    emb_tbm = jnp.transpose(emb, (1, 0, 2))                    # (T, B, 2M)
    _, hs = lax.scan(step, jnp.zeros((x_btm.shape[0], H), jnp.float32), emb_tbm)
    hs_btm = jnp.transpose(hs, (1, 0, 2))                      # (B, T, H)
    return hs_btm @ p["wc"] + p["bc"]


if __name__ == "__main__":
    key = jax.random.PRNGKey(0)
    kp, kx = jax.random.split(key)

    params = init_params(kp)
    fused = prepare_params(params)
    x = jax.random.normal(kx, (B, T, M), jnp.float32)

    out = jax.block_until_ready(mmaid_forward(x, fused))
    ref = jax.block_until_ready(mmaid_reference(x, params))

    assert out.shape == (B, T, M)
    assert jnp.allclose(out, ref, atol=1e-4, rtol=1e-4), \
        float(jnp.max(jnp.abs(out - ref)))

    print("KERNEL_OK")
</pallas_src>

<mosaic_0001>
module attributes {stable_mosaic.version = 11 : i64} {
  func.func @mmaid_kernel(%arg0: memref<16x32xf32, #tpu.memory_space<vmem>>, %arg1: memref<32x64xf32, #tpu.memory_space<vmem>>, %arg2: memref<1x64xf32, #tpu.memory_space<vmem>>, %arg3: memref<64x96xf32, #tpu.memory_space<vmem>>, %arg4: memref<1x96xf32, #tpu.memory_space<vmem>>, %arg5: memref<32x96xf32, #tpu.memory_space<vmem>>, %arg6: memref<1x32xf32, #tpu.memory_space<vmem>>, %arg7: memref<32x32xf32, #tpu.memory_space<vmem>>, %arg8: memref<1x32xf32, #tpu.memory_space<vmem>>, %arg9: memref<16x32xf32, #tpu.memory_space<vmem>>) attributes {dimension_semantics = [], scalar_prefetch = 0 : i64, scratch_operands = 0 : i64, tpu.core_type = #tpu.core_type<tc>} {
    %c0 = arith.constant 0 : index
    %c0_0 = arith.constant 0 : index
    %0 = vector.load %arg0[%c0, %c0_0] : memref<16x32xf32, #tpu.memory_space<vmem>>, vector<16x32xf32>
    %c0_1 = arith.constant 0 : index
    %c0_2 = arith.constant 0 : index
    %1 = vector.load %arg1[%c0_1, %c0_2] : memref<32x64xf32, #tpu.memory_space<vmem>>, vector<32x64xf32>
    %cst = arith.constant dense<0.000000e+00> : vector<16x64xf32>
    %2 = tpu.matmul %0, %1, %cst {dimension_numbers = #tpu.dot_dimension_numbers<[1], [0], [0], [1], [0, 0, 1, 1], [], []>} : vector<16x32xf32>, vector<32x64xf32>, vector<16x64xf32> -> vector<16x64xf32>
    %c0_3 = arith.constant 0 : index
    %c0_4 = arith.constant 0 : index
    %3 = vector.load %arg2[%c0_3, %c0_4] : memref<1x64xf32, #tpu.memory_space<vmem>>, vector<1x64xf32>
    %4 = vector.broadcast %3 : vector<1x64xf32> to vector<16x64xf32>
    %5 = arith.addf %2, %4 : vector<16x64xf32>
    %cst_5 = arith.constant 0.000000e+00 : f32
    %6 = vector.broadcast %cst_5 : f32 to vector<16x64xf32>
    %7 = arith.maximumf %5, %6 : vector<16x64xf32>
    %c0_6 = arith.constant 0 : index
    %c0_7 = arith.constant 0 : index
    %8 = vector.load %arg3[%c0_6, %c0_7] : memref<64x96xf32, #tpu.memory_space<vmem>>, vector<64x96xf32>
    %cst_8 = arith.constant dense<0.000000e+00> : vector<16x96xf32>
    %9 = tpu.matmul %7, %8, %cst_8 {dimension_numbers = #tpu.dot_dimension_numbers<[1], [0], [0], [1], [0, 0, 1, 1], [], []>} : vector<16x64xf32>, vector<64x96xf32>, vector<16x96xf32> -> vector<16x96xf32>
    %c0_9 = arith.constant 0 : index
    %c0_10 = arith.constant 0 : index
    %10 = vector.load %arg4[%c0_9, %c0_10] : memref<1x96xf32, #tpu.memory_space<vmem>>, vector<1x96xf32>
    %11 = vector.broadcast %10 : vector<1x96xf32> to vector<16x96xf32>
    %12 = arith.addf %9, %11 : vector<16x96xf32>
    %c0_11 = arith.constant 0 : index
    %c0_12 = arith.constant 0 : index
    %13 = vector.load %arg5[%c0_11, %c0_12] : memref<32x96xf32, #tpu.memory_space<vmem>>, vector<32x96xf32>
    %c0_13 = arith.constant 0 : index
    %c0_14 = arith.constant 0 : index
    %14 = vector.load %arg6[%c0_13, %c0_14] : memref<1x32xf32, #tpu.memory_space<vmem>>, vector<1x32xf32>
    %15 = vector.shape_cast %14 : vector<1x32xf32> to vector<1x32xf32>
    %16 = vector.broadcast %15 : vector<1x32xf32> to vector<2x32xf32>
    %cst_15 = arith.constant 0.000000e+00 : f32
    %17 = vector.broadcast %cst_15 : f32 to vector<2x32xf32>
    %18 = vector.extract_strided_slice %12 {offsets = [0, 0], sizes = [2, 96], strides = [1, 1]} : vector<16x96xf32> to vector<2x96xf32>
    %cst_16 = arith.constant dense<0.000000e+00> : vector<2x96xf32>
    %19 = tpu.matmul %17, %13, %cst_16 {dimension_numbers = #tpu.dot_dimension_numbers<[1], [0], [0], [1], [0, 0, 1, 1], [], []>} : vector<2x32xf32>, vector<32x96xf32>, vector<2x96xf32> -> vector<2x96xf32>
    %20 = vector.extract_strided_slice %18 {offsets = [0, 0], sizes = [2, 64], strides = [1, 1]} : vector<2x96xf32> to vector<2x64xf32>
    %21 = vector.extract_strided_slice %19 {offsets = [0, 0], sizes = [2, 64], strides = [1, 1]} : vector<2x96xf32> to vector<2x64xf32>
    %22 = arith.addf %20, %21 : vector<2x64xf32>
    %23 = arith.negf %22 : vector<2x64xf32>
    %24 = math.exp %23 : vector<2x64xf32>
    %cst_17 = arith.constant 1.000000e+00 : f32
    %25 = vector.broadcast %cst_17 : f32 to vector<2x64xf32>
    %26 = arith.addf %25, %24 : vector<2x64xf32>
    %27 = arith.divf %25, %26 : vector<2x64xf32>
    %28 = vector.extract_strided_slice %27 {offsets = [0, 0], sizes = [2, 32], strides = [1, 1]} : vector<2x64xf32> to vector<2x32xf32>
    %29 = vector.extract_strided_slice %27 {offsets = [0, 32], sizes = [2, 32], strides = [1, 1]} : vector<2x64xf32> to vector<2x32xf32>
    %30 = vector.extract_strided_slice %18 {offsets = [0, 64], sizes = [2, 32], strides = [1, 1]} : vector<2x96xf32> to vector<2x32xf32>
    %31 = vector.extract_strided_slice %19 {offsets = [0, 64], sizes = [2, 32], strides = [1, 1]} : vector<2x96xf32> to vector<2x32xf32>
    %32 = arith.addf %31, %16 : vector<2x32xf32>
    %33 = arith.mulf %28, %32 : vector<2x32xf32>
    %34 = arith.addf %30, %33 : vector<2x32xf32>
    %35 = math.tanh %34 : vector<2x32xf32>
    %36 = arith.subf %17, %35 : vector<2x32xf32>
    %37 = arith.mulf %29, %36 : vector<2x32xf32>
    %38 = arith.addf %35, %37 : vector<2x32xf32>
    %39 = vector.extract_strided_slice %12 {offsets = [2, 0], sizes = [2, 96], strides = [1, 1]} : vector<16x96xf32> to vector<2x96xf32>
    %cst_18 = arith.constant dense<0.000000e+00> : vector<2x96xf32>
    %40 = tpu.matmul %38, %13, %cst_18 {dimension_numbers = #tpu.dot_dimension_numbers<[1], [0], [0], [1], [0, 0, 1, 1], [], []>} : vector<2x32xf32>, vector<32x96xf32>, vector<2x96xf32> -> vector<2x96xf32>
    %41 = vector.extract_strided_slice %39 {offsets = [0, 0], sizes = [2, 64], strides = [1, 1]} : vector<2x96xf32> to vector<2x64xf32>
    %42 = vector.extract_strided_slice %40 {offsets = [0, 0], sizes = [2, 64], strides = [1, 1]} : vector<2x96xf32> to vector<2x64xf32>
    %43 = arith.addf %41, %42 : vector<2x64xf32>
    %44 = arith.negf %43 : vector<2x64xf32>
    %45 = math.exp %44 : vector<2x64xf32>
    %cst_19 = arith.constant 1.000000e+00 : f32
    %46 = vector.broadcast %cst_19 : f32 to vector<2x64xf32>
    %47 = arith.addf %46, %45 : vector<2x64xf32>
    %48 = arith.divf %46, %47 : vector<2x64xf32>
    %49 = vector.extract_strided_slice %48 {offsets = [0, 0], sizes = [2, 32], strides = [1, 1]} : vector<2x64xf32> to vector<2x32xf32>
    %50 = vector.extract_strided_slice %48 {offsets = [0, 32], sizes = [2, 32], strides = [1, 1]} : vector<2x64xf32> to vector<2x32xf32>
    %51 = vector.extract_strided_slice %39 {offsets = [0, 64], sizes = [2, 32], strides = [1, 1]} : vector<2x96xf32> to vector<2x32xf32>
    %52 = vector.extract_strided_slice %40 {offsets = [0, 64], sizes = [2, 32], strides = [1, 1]} : vector<2x96xf32> to vector<2x32xf32>
    %53 = arith.addf %52, %16 : vector<2x32xf32>
    %54 = arith.mulf %49, %53 : vector<2x32xf32>
    %55 = arith.addf %51, %54 : vector<2x32xf32>
    %56 = math.tanh %55 : vector<2x32xf32>
    %57 = arith.subf %38, %56 : vector<2x32xf32>
    %58 = arith.mulf %50, %57 : vector<2x32xf32>
    %59 = arith.addf %56, %58 : vector<2x32xf32>
    %60 = vector.extract_strided_slice %12 {offsets = [4, 0], sizes = [2, 96], strides = [1, 1]} : vector<16x96xf32> to vector<2x96xf32>
    %cst_20 = arith.constant dense<0.000000e+00> : vector<2x96xf32>
    %61 = tpu.matmul %59, %13, %cst_20 {dimension_numbers = #tpu.dot_dimension_numbers<[1], [0], [0], [1], [0, 0, 1, 1], [], []>} : vector<2x32xf32>, vector<32x96xf32>, vector<2x96xf32> -> vector<2x96xf32>
    %62 = vector.extract_strided_slice %60 {offsets = [0, 0], sizes = [2, 64], strides = [1, 1]} : vector<2x96xf32> to vector<2x64xf32>
    %63 = vector.extract_strided_slice %61 {offsets = [0, 0], sizes = [2, 64], strides = [1, 1]} : vector<2x96xf32> to vector<2x64xf32>
    %64 = arith.addf %62, %63 : vector<2x64xf32>
    %65 = arith.negf %64 : vector<2x64xf32>
    %66 = math.exp %65 : vector<2x64xf32>
    %cst_21 = arith.constant 1.000000e+00 : f32
    %67 = vector.broadcast %cst_21 : f32 to vector<2x64xf32>
    %68 = arith.addf %67, %66 : vector<2x64xf32>
    %69 = arith.divf %67, %68 : vector<2x64xf32>
    %70 = vector.extract_strided_slice %69 {offsets = [0, 0], sizes = [2, 32], strides = [1, 1]} : vector<2x64xf32> to vector<2x32xf32>
    %71 = vector.extract_strided_slice %69 {offsets = [0, 32], sizes = [2, 32], strides = [1, 1]} : vector<2x64xf32> to vector<2x32xf32>
    %72 = vector.extract_strided_slice %60 {offsets = [0, 64], sizes = [2, 32], strides = [1, 1]} : vector<2x96xf32> to vector<2x32xf32>
    %73 = vector.extract_strided_slice %61 {offsets = [0, 64], sizes = [2, 32], strides = [1, 1]} : vector<2x96xf32> to vector<2x32xf32>
    %74 = arith.addf %73, %16 : vector<2x32xf32>
    %75 = arith.mulf %70, %74 : vector<2x32xf32>
    %76 = arith.addf %72, %75 : vector<2x32xf32>
    %77 = math.tanh %76 : vector<2x32xf32>
    %78 = arith.subf %59, %77 : vector<2x32xf32>
    %79 = arith.mulf %71, %78 : vector<2x32xf32>
    %80 = arith.addf %77, %79 : vector<2x32xf32>
    %81 = vector.extract_strided_slice %12 {offsets = [6, 0], sizes = [2, 96], strides = [1, 1]} : vector<16x96xf32> to vector<2x96xf32>
    %cst_22 = arith.constant dense<0.000000e+00> : vector<2x96xf32>
    %82 = tpu.matmul %80, %13, %cst_22 {dimension_numbers = #tpu.dot_dimension_numbers<[1], [0], [0], [1], [0, 0, 1, 1], [], []>} : vector<2x32xf32>, vector<32x96xf32>, vector<2x96xf32> -> vector<2x96xf32>
    %83 = vector.extract_strided_slice %81 {offsets = [0, 0], sizes = [2, 64], strides = [1, 1]} : vector<2x96xf32> to vector<2x64xf32>
    %84 = vector.extract_strided_slice %82 {offsets = [0, 0], sizes = [2, 64], strides = [1, 1]} : vector<2x96xf32> to vector<2x64xf32>
    %85 = arith.addf %83, %84 : vector<2x64xf32>
    %86 = arith.negf %85 : vector<2x64xf32>
    %87 = math.exp %86 : vector<2x64xf32>
    %cst_23 = arith.constant 1.000000e+00 : f32
    %88 = vector.broadcast %cst_23 : f32 to vector<2x64xf32>
    %89 = arith.addf %88, %87 : vector<2x64xf32>
    %90 = arith.divf %88, %89 : vector<2x64xf32>
    %91 = vector.extract_strided_slice %90 {offsets = [0, 0], sizes = [2, 32], strides = [1, 1]} : vector<2x64xf32> to vector<2x32xf32>
    %92 = vector.extract_strided_slice %90 {offsets = [0, 32], sizes = [2, 32], strides = [1, 1]} : vector<2x64xf32> to vector<2x32xf32>
    %93 = vector.extract_strided_slice %81 {offsets = [0, 64], sizes = [2, 32], strides = [1, 1]} : vector<2x96xf32> to vector<2x32xf32>
    %94 = vector.extract_strided_slice %82 {offsets = [0, 64], sizes = [2, 32], strides = [1, 1]} : vector<2x96xf32> to vector<2x32xf32>
    %95 = arith.addf %94, %16 : vector<2x32xf32>
    %96 = arith.mulf %91, %95 : vector<2x32xf32>
    %97 = arith.addf %93, %96 : vector<2x32xf32>
    %98 = math.tanh %97 : vector<2x32xf32>
    %99 = arith.subf %80, %98 : vector<2x32xf32>
    %100 = arith.mulf %92, %99 : vector<2x32xf32>
    %101 = arith.addf %98, %100 : vector<2x32xf32>
    %102 = vector.extract_strided_slice %12 {offsets = [8, 0], sizes = [2, 96], strides = [1, 1]} : vector<16x96xf32> to vector<2x96xf32>
    %cst_24 = arith.constant dense<0.000000e+00> : vector<2x96xf32>
    %103 = tpu.matmul %101, %13, %cst_24 {dimension_numbers = #tpu.dot_dimension_numbers<[1], [0], [0], [1], [0, 0, 1, 1], [], []>} : vector<2x32xf32>, vector<32x96xf32>, vector<2x96xf32> -> vector<2x96xf32>
    %104 = vector.extract_strided_slice %102 {offsets = [0, 0], sizes = [2, 64], strides = [1, 1]} : vector<2x96xf32> to vector<2x64xf32>
    %105 = vector.extract_strided_slice %103 {offsets = [0, 0], sizes = [2, 64], strides = [1, 1]} : vector<2x96xf32> to vector<2x64xf32>
    %106 = arith.addf %104, %105 : vector<2x64xf32>
    %107 = arith.negf %106 : vector<2x64xf32>
    %108 = math.exp %107 : vector<2x64xf32>
    %cst_25 = arith.constant 1.000000e+00 : f32
    %109 = vector.broadcast %cst_25 : f32 to vector<2x64xf32>
    %110 = arith.addf %109, %108 : vector<2x64xf32>
    %111 = arith.divf %109, %110 : vector<2x64xf32>
    %112 = vector.extract_strided_slice %111 {offsets = [0, 0], sizes = [2, 32], strides = [1, 1]} : vector<2x64xf32> to vector<2x32xf32>
    %113 = vector.extract_strided_slice %111 {offsets = [0, 32], sizes = [2, 32], strides = [1, 1]} : vector<2x64xf32> to vector<2x32xf32>
    %114 = vector.extract_strided_slice %102 {offsets = [0, 64], sizes = [2, 32], strides = [1, 1]} : vector<2x96xf32> to vector<2x32xf32>
    %115 = vector.extract_strided_slice %103 {offsets = [0, 64], sizes = [2, 32], strides = [1, 1]} : vector<2x96xf32> to vector<2x32xf32>
    %116 = arith.addf %115, %16 : vector<2x32xf32>
    %117 = arith.mulf %112, %116 : vector<2x32xf32>
    %118 = arith.addf %114, %117 : vector<2x32xf32>
    %119 = math.tanh %118 : vector<2x32xf32>
    %120 = arith.subf %101, %119 : vector<2x32xf32>
    %121 = arith.mulf %113, %120 : vector<2x32xf32>
    %122 = arith.addf %119, %121 : vector<2x32xf32>
    %123 = vector.extract_strided_slice %12 {offsets = [10, 0], sizes = [2, 96], strides = [1, 1]} : vector<16x96xf32> to vector<2x96xf32>
    %cst_26 = arith.constant dense<0.000000e+00> : vector<2x96xf32>
    %124 = tpu.matmul %122, %13, %cst_26 {dimension_numbers = #tpu.dot_dimension_numbers<[1], [0], [0], [1], [0, 0, 1, 1], [], []>} : vector<2x32xf32>, vector<32x96xf32>, vector<2x96xf32> -> vector<2x96xf32>
    %125 = vector.extract_strided_slice %123 {offsets = [0, 0], sizes = [2, 64], strides = [1, 1]} : vector<2x96xf32> to vector<2x64xf32>
    %126 = vector.extract_strided_slice %124 {offsets = [0, 0], sizes = [2, 64], strides = [1, 1]} : vector<2x96xf32> to vector<2x64xf32>
    %127 = arith.addf %125, %126 : vector<2x64xf32>
    %128 = arith.negf %127 : vector<2x64xf32>
    %129 = math.exp %128 : vector<2x64xf32>
    %cst_27 = arith.constant 1.000000e+00 : f32
    %130 = vector.broadcast %cst_27 : f32 to vector<2x64xf32>
    %131 = arith.addf %130, %129 : vector<2x64xf32>
    %132 = arith.divf %130, %131 : vector<2x64xf32>
    %133 = vector.extract_strided_slice %132 {offsets = [0, 0], sizes = [2, 32], strides = [1, 1]} : vector<2x64xf32> to vector<2x32xf32>
    %134 = vector.extract_strided_slice %132 {offsets = [0, 32], sizes = [2, 32], strides = [1, 1]} : vector<2x64xf32> to vector<2x32xf32>
    %135 = vector.extract_strided_slice %123 {offsets = [0, 64], sizes = [2, 32], strides = [1, 1]} : vector<2x96xf32> to vector<2x32xf32>
    %136 = vector.extract_strided_slice %124 {offsets = [0, 64], sizes = [2, 32], strides = [1, 1]} : vector<2x96xf32> to vector<2x32xf32>
    %137 = arith.addf %136, %16 : vector<2x32xf32>
    %138 = arith.mulf %133, %137 : vector<2x32xf32>
    %139 = arith.addf %135, %138 : vector<2x32xf32>
    %140 = math.tanh %139 : vector<2x32xf32>
    %141 = arith.subf %122, %140 : vector<2x32xf32>
    %142 = arith.mulf %134, %141 : vector<2x32xf32>
    %143 = arith.addf %140, %142 : vector<2x32xf32>
    %144 = vector.extract_strided_slice %12 {offsets = [12, 0], sizes = [2, 96], strides = [1, 1]} : vector<16x96xf32> to vector<2x96xf32>
    %cst_28 = arith.constant dense<0.000000e+00> : vector<2x96xf32>
    %145 = tpu.matmul %143, %13, %cst_28 {dimension_numbers = #tpu.dot_dimension_numbers<[1], [0], [0], [1], [0, 0, 1, 1], [], []>} : vector<2x32xf32>, vector<32x96xf32>, vector<2x96xf32> -> vector<2x96xf32>
    %146 = vector.extract_strided_slice %144 {offsets = [0, 0], sizes = [2, 64], strides = [1, 1]} : vector<2x96xf32> to vector<2x64xf32>
    %147 = vector.extract_strided_slice %145 {offsets = [0, 0], sizes = [2, 64], strides = [1, 1]} : vector<2x96xf32> to vector<2x64xf32>
    %148 = arith.addf %146, %147 : vector<2x64xf32>
    %149 = arith.negf %148 : vector<2x64xf32>
    %150 = math.exp %149 : vector<2x64xf32>
    %cst_29 = arith.constant 1.000000e+00 : f32
    %151 = vector.broadcast %cst_29 : f32 to vector<2x64xf32>
    %152 = arith.addf %151, %150 : vector<2x64xf32>
    %153 = arith.divf %151, %152 : vector<2x64xf32>
    %154 = vector.extract_strided_slice %153 {offsets = [0, 0], sizes = [2, 32], strides = [1, 1]} : vector<2x64xf32> to vector<2x32xf32>
    %155 = vector.extract_strided_slice %153 {offsets = [0, 32], sizes = [2, 32], strides = [1, 1]} : vector<2x64xf32> to vector<2x32xf32>
    %156 = vector.extract_strided_slice %144 {offsets = [0, 64], sizes = [2, 32], strides = [1, 1]} : vector<2x96xf32> to vector<2x32xf32>
    %157 = vector.extract_strided_slice %145 {offsets = [0, 64], sizes = [2, 32], strides = [1, 1]} : vector<2x96xf32> to vector<2x32xf32>
    %158 = arith.addf %157, %16 : vector<2x32xf32>
    %159 = arith.mulf %154, %158 : vector<2x32xf32>
    %160 = arith.addf %156, %159 : vector<2x32xf32>
    %161 = math.tanh %160 : vector<2x32xf32>
    %162 = arith.subf %143, %161 : vector<2x32xf32>
    %163 = arith.mulf %155, %162 : vector<2x32xf32>
    %164 = arith.addf %161, %163 : vector<2x32xf32>
    %165 = vector.extract_strided_slice %12 {offsets = [14, 0], sizes = [2, 96], strides = [1, 1]} : vector<16x96xf32> to vector<2x96xf32>
    %cst_30 = arith.constant dense<0.000000e+00> : vector<2x96xf32>
    %166 = tpu.matmul %164, %13, %cst_30 {dimension_numbers = #tpu.dot_dimension_numbers<[1], [0], [0], [1], [0, 0, 1, 1], [], []>} : vector<2x32xf32>, vector<32x96xf32>, vector<2x96xf32> -> vector<2x96xf32>
    %167 = vector.extract_strided_slice %165 {offsets = [0, 0], sizes = [2, 64], strides = [1, 1]} : vector<2x96xf32> to vector<2x64xf32>
    %168 = vector.extract_strided_slice %166 {offsets = [0, 0], sizes = [2, 64], strides = [1, 1]} : vector<2x96xf32> to vector<2x64xf32>
    %169 = arith.addf %167, %168 : vector<2x64xf32>
    %170 = arith.negf %169 : vector<2x64xf32>
    %171 = math.exp %170 : vector<2x64xf32>
    %cst_31 = arith.constant 1.000000e+00 : f32
    %172 = vector.broadcast %cst_31 : f32 to vector<2x64xf32>
    %173 = arith.addf %172, %171 : vector<2x64xf32>
    %174 = arith.divf %172, %173 : vector<2x64xf32>
    %175 = vector.extract_strided_slice %174 {offsets = [0, 0], sizes = [2, 32], strides = [1, 1]} : vector<2x64xf32> to vector<2x32xf32>
    %176 = vector.extract_strided_slice %174 {offsets = [0, 32], sizes = [2, 32], strides = [1, 1]} : vector<2x64xf32> to vector<2x32xf32>
    %177 = vector.extract_strided_slice %165 {offsets = [0, 64], sizes = [2, 32], strides = [1, 1]} : vector<2x96xf32> to vector<2x32xf32>
    %178 = vector.extract_strided_slice %166 {offsets = [0, 64], sizes = [2, 32], strides = [1, 1]} : vector<2x96xf32> to vector<2x32xf32>
    %179 = arith.addf %178, %16 : vector<2x32xf32>
    %180 = arith.mulf %175, %179 : vector<2x32xf32>
    %181 = arith.addf %177, %180 : vector<2x32xf32>
    %182 = math.tanh %181 : vector<2x32xf32>
    %183 = arith.subf %164, %182 : vector<2x32xf32>
    %184 = arith.mulf %176, %183 : vector<2x32xf32>
    %185 = arith.addf %182, %184 : vector<2x32xf32>
    %186 = tpu.concatenate %38, %59, %80, %101, %122, %143, %164, %185 in 0 : vector<2x32xf32>, vector<2x32xf32>, vector<2x32xf32>, vector<2x32xf32>, vector<2x32xf32>, vector<2x32xf32>, vector<2x32xf32>, vector<2x32xf32> -> vector<16x32xf32>
    %c0_32 = arith.constant 0 : index
    %c0_33 = arith.constant 0 : index
    %187 = vector.load %arg7[%c0_32, %c0_33] : memref<32x32xf32, #tpu.memory_space<vmem>>, vector<32x32xf32>
    %cst_34 = arith.constant dense<0.000000e+00> : vector<16x32xf32>
    %188 = tpu.matmul %186, %187, %cst_34 {dimension_numbers = #tpu.dot_dimension_numbers<[1], [0], [0], [1], [0, 0, 1, 1], [], []>} : vector<16x32xf32>, vector<32x32xf32>, vector<16x32xf32> -> vector<16x32xf32>
    %c0_35 = arith.constant 0 : index
    %c0_36 = arith.constant 0 : index
    %189 = vector.load %arg8[%c0_35, %c0_36] : memref<1x32xf32, #tpu.memory_space<vmem>>, vector<1x32xf32>
    %190 = vector.broadcast %189 : vector<1x32xf32> to vector<16x32xf32>
    %191 = arith.addf %188, %190 : vector<16x32xf32>
    %c0_37 = arith.constant 0 : index
    %c0_38 = arith.constant 0 : index
    %192 = vector.load %arg9[%c0_37, %c0_38] : memref<16x32xf32, #tpu.memory_space<vmem>>, vector<16x32xf32>
    tpu.vector_store %arg9[%c0_37, %c0_38], %191 {strides = array<i32>} : memref<16x32xf32, #tpu.memory_space<vmem>>, vector<16x32xf32>,
    return
  }
}

</mosaic_0001>

<llo_original>
// kernel: mmaid_forward.1
$region0: #{mmaid_forward.1}
  #allocation0 [shape = 'u32[]', space=smem, size = 0x4, offset = 0x4, fixed_abs, tag = 'smem constant byte address 0x4 - core index']
  #allocation1 [shape = 'u32[144,128]{1,0:T(1,128)}', space=vmem, size = 0x12000, scoped, tag = 'internal scratch']
  %s0 = inlined_call_operand.vmem [shape: f32[16,32], index: 0, kind: input, shape index: {}]
  %s1 = inlined_call_operand.hbm [shape: f32[32,64], index: 1, kind: input, shape index: {}]
  %s2 = inlined_call_operand.vmem [shape: f32[1,64], index: 2, kind: input, shape index: {}]
  %s3 = inlined_call_operand.vmem [shape: f32[64,96], index: 3, kind: input, shape index: {}]
  %s4 = inlined_call_operand.vmem [shape: f32[1,96], index: 4, kind: input, shape index: {}]
  %s5 = inlined_call_operand.hbm [shape: f32[32,96], index: 5, kind: input, shape index: {}]
  %s6 = inlined_call_operand.vmem [shape: f32[1,32], index: 6, kind: input, shape index: {}]
  %s7 = inlined_call_operand.hbm [shape: f32[32,32], index: 7, kind: input, shape index: {}]
  %s8 = inlined_call_operand.vmem [shape: f32[1,32], index: 8, kind: input, shape index: {}]
  %s9 = inlined_call_operand.vmem [shape: f32[16,32], index: 9, kind: output, shape index: {}]
  %s10 = sld [smem:[#allocation0]]
  $region58: #{mmaid_forward.1} parent=0
    _
  %s12 = ssub.s32 1, %s10
  %s13 = scalar_select 0, %s12, %s10
  $region1: #{mmaid_forward.1} parent=0
    #allocation2 [shape = 'u8[16384]{0}', space=vmem, size = 0x4000, scoped, tag = 'input window, operand 1, single buffered']
    #allocation3 [shape = 's32[1]{0}', space=sflag, size = 0x4, scoped, tag = 'scoped memory for mmaid_forward.1']
    #allocation4 [shape = 'u8[16384]{0}', space=vmem, size = 0x4000, scoped, tag = 'input window, operand 5, single buffered']
    #allocation5 [shape = 's32[1]{0}', space=sflag, size = 0x4, scoped, tag = 'scoped memory for mmaid_forward.1']
    #allocation6 [shape = 'u8[16384]{0}', space=vmem, size = 0x4000, scoped, tag = 'input window, operand 7, single buffered']
    %14 = vsyncpa [#allocation3], 0
    %15 = vsyncpa [#allocation5], 0
    // Predicated region
    $region2: #{mmaid_forward.1} parent=1 // pred_check
      _
    $region3: #{mmaid_forward.1} parent=1 // pred_check_branch
      %17 = sbr.rel (0) target = $region5
    $region4: #{mmaid_forward.1} parent=1 // pred_region
      _
    $region5: #{mmaid_forward.1} parent=1 // pred_fallthru
      _
    // Predicated region
    $region6: #{mmaid_forward.1} parent=1 // pred_check
      _
    $region7: #{mmaid_forward.1} parent=1 // pred_check_branch
      %19 = sbr.rel (0) target = $region9
    $region8: #{mmaid_forward.1} parent=1 // pred_region
      %s21 = ssub.s32 512, 512
      %22 = vsyncadd [#allocation3], %s21
      %s23 = sshll.u32 [#allocation2], 4
      %s24 = int_to_ptr.vmem [resolvable:$true] %s23
      %29 = dma.hbm_to_vmem [thread:$0]  %s1, 512, %s24, [#allocation3], 128, 128, 8
    $region9: #{mmaid_forward.1} parent=1 // pred_fallthru
      _
    // Predicated region
    $region10: #{mmaid_forward.1} parent=1 // pred_check
      _
    $region11: #{mmaid_forward.1} parent=1 // pred_check_branch
      %31 = sbr.rel (0) target = $region13
    $region12: #{mmaid_forward.1} parent=1 // pred_region
      _
    $region13: #{mmaid_forward.1} parent=1 // pred_fallthru
      _
    // Predicated region
    $region14: #{mmaid_forward.1} parent=1 // pred_check
      _
    $region15: #{mmaid_forward.1} parent=1 // pred_check_branch
      %33 = sbr.rel (0) target = $region17
    $region16: #{mmaid_forward.1} parent=1 // pred_region
      _
    $region17: #{mmaid_forward.1} parent=1 // pred_fallthru
      _
    // Predicated region
    $region18: #{mmaid_forward.1} parent=1 // pred_check
      _
    $region19: #{mmaid_forward.1} parent=1 // pred_check_branch
      %35 = sbr.rel (0) target = $region21
    $region20: #{mmaid_forward.1} parent=1 // pred_region
      _
    $region21: #{mmaid_forward.1} parent=1 // pred_fallthru
      _
    // Predicated region
    $region22: #{mmaid_forward.1} parent=1 // pred_check
      _
    $region23: #{mmaid_forward.1} parent=1 // pred_check_branch
      %37 = sbr.rel (0) target = $region25
    $region24: #{mmaid_forward.1} parent=1 // pred_region
      %s39 = ssub.s32 512, 512
      %40 = vsyncadd [#allocation5], %s39
      %s41 = sshll.u32 [#allocation4], 4
      %s42 = int_to_ptr.vmem [resolvable:$true] %s41
      %47 = dma.hbm_to_vmem [thread:$0]  %s5, 512, %s42, [#allocation5], 128, 128, 8
    $region25: #{mmaid_forward.1} parent=1 // pred_fallthru
      _
    // Predicated region
    $region26: #{mmaid_forward.1} parent=1 // pred_check
      _
    $region27: #{mmaid_forward.1} parent=1 // pred_check_branch
      %49 = sbr.rel (0) target = $region29
    $region28: #{mmaid_forward.1} parent=1 // pred_region
      _
    $region29: #{mmaid_forward.1} parent=1 // pred_fallthru
      _
    // Predicated region
    $region30: #{mmaid_forward.1} parent=1 // pred_check
      _
    $region31: #{mmaid_forward.1} parent=1 // pred_check_branch
      %51 = sbr.rel (0) target = $region33
    $region32: #{mmaid_forward.1} parent=1 // pred_region
      %s53 = ssub.s32 512, 512
      %54 = vsyncadd [#allocation5], %s53
      %s55 = sshll.u32 [#allocation6], 4
      %s56 = int_to_ptr.vmem [resolvable:$true] %s55
      %61 = dma.hbm_to_vmem [thread:$0]  %s7, 512, %s56, [#allocation5], 128, 128, 8
    $region33: #{mmaid_forward.1} parent=1 // pred_fallthru
      _
    // Predicated region
    $region34: #{mmaid_forward.1} parent=1 // pred_check
      _
    $region35: #{mmaid_forward.1} parent=1 // pred_check_branch
      %63 = sbr.rel (0) target = $region37
    $region36: #{mmaid_forward.1} parent=1 // pred_region
      _
    $region37: #{mmaid_forward.1} parent=1 // pred_fallthru
      _
    // Predicated region
    $region38: #{mmaid_forward.1} parent=1 // pred_check
      _
    $region39: #{mmaid_forward.1} parent=1 // pred_check_branch
      %65 = sbr.rel (0) target = $region41
    $region40: #{mmaid_forward.1} parent=1 // pred_region
      %66 = dma.done [#allocation3], 512
    $region41: #{mmaid_forward.1} parent=1 // pred_fallthru
      _
    // Predicated region
    $region42: #{mmaid_forward.1} parent=1 // pred_check
      _
    $region43: #{mmaid_forward.1} parent=1 // pred_check_branch
      %68 = sbr.rel (0) target = $region45
    $region44: #{mmaid_forward.1} parent=1 // pred_region
      %69 = dma.done [#allocation5], 512
    $region45: #{mmaid_forward.1} parent=1 // pred_fallthru
      _
    // Predicated region
    $region46: #{mmaid_forward.1} parent=1 // pred_check
      _
    $region47: #{mmaid_forward.1} parent=1 // pred_check_branch
      %71 = sbr.rel (0) target = $region49
    $region48: #{mmaid_forward.1} parent=1 // pred_region
      %72 = dma.done [#allocation5], 512
    $region49: #{mmaid_forward.1} parent=1 // pred_fallthru
      _
    %v73 = vld [vmem:[%s0] sm:$0xff]
    %v74 = vld [vmem:[%s0 + $0x8] sm:$0xff]
    %v75 = vld [vmem:[#allocation2] sm:$0xff]
    %v76 = vld [vmem:[#allocation2 + $0x8] sm:$0xff]
    %v77 = vld [vmem:[#allocation2 + $0x10] sm:$0xff]
    %v78 = vld [vmem:[#allocation2 + $0x18] sm:$0xff]
    %v79 = vld [vmem:[%s2] sm:$0x1]
    %v81 = vlaneseq
    %v82 = vshrl.u32 %v81, 7
    %v83 = vsub.s32 0, %v82
    %v84 = vrot.slane %v79, %v83
    %vm86 = vcmask 261120
    %v88 = vsel %vm86, %v73, 0
    %v91 = vsel %vm86, %v74, 0
    %93 = vmatprep.subr.mxu0 0.0
    %94 = vmatpush1.msra.mxu0 %v75
    %95 = vmatprep.subr.mxu0 0.0
    %96 = vmatpush1.msra.mxu0 %v76
    %97 = vmatprep.subr.mxu0 0.0
    %98 = vmatpush1.msra.mxu0 %v77
    %99 = vmatprep.subr.mxu0 0.0
    %100 = vmatpush1.msra.mxu0 %v78
    %101 = vmatprep.subr.mxu0 0.0
    %102 = vmatpush1.msra.mxu0 0.0
    %103 = vmatprep.subr.mxu0 0.0
    %104 = vmatpush1.msra.mxu0 0.0
    %105 = vmatprep.subr.mxu0 0.0
    %106 = vmatpush1.msra.mxu0 0.0
    %107 = vmatprep.subr.mxu0 0.0
    %108 = vmatpush1.msra.mxu0 0.0
    %109 = vmatprep.subr.mxu0 0.0
    %110 = vmatpush1.msra.mxu0 0.0
    %111 = vmatprep.subr.mxu0 0.0
    %112 = vmatpush1.msra.mxu0 0.0
    %113 = vmatprep.subr.mxu0 0.0
    %114 = vmatpush1.msra.mxu0 0.0
    %115 = vmatprep.subr.mxu0 0.0
    %116 = vmatpush1.msra.mxu0 0.0
    %117 = vmatprep.subr.mxu0 0.0
    %118 = vmatpush1.msra.mxu0 0.0
    %119 = vmatprep.subr.mxu0 0.0
    %120 = vmatpush1.msra.mxu0 0.0
    %121 = vmatprep.subr.mxu0 0.0
    %122 = vmatpush1.msra.mxu0 0.0
    %123 = vmatprep.subr.mxu0 0.0
    %124 = vmatpush1.msra.mxu0 0.0
    %125 = vmatprep.subr.mxu0 0.0
    %126 = vmatpush1.msra.mxu0 0.0
    %127 = vmatprep.subr.mxu0 0.0
    %128 = vmatpush1.msra.mxu0 0.0
    %129 = vmatprep.subr.mxu0 0.0
    %130 = vmatpush1.msra.mxu0 0.0
    %131 = vmatprep.subr.mxu0 0.0
    %132 = vmatpush1.msra.mxu0 0.0
    %133 = vmatprep.subr.mxu0 0.0
    %134 = vmatpush1.msra.mxu0 0.0
    %135 = vmatprep.subr.mxu0 0.0
    %136 = vmatpush1.msra.mxu0 0.0
    %137 = vmatprep.subr.mxu0 0.0
    %138 = vmatpush1.msra.mxu0 0.0
    %139 = vmatprep.subr.mxu0 0.0
    %140 = vmatpush1.msra.mxu0 0.0
    %141 = vmatprep.subr.mxu0 0.0
    %142 = vmatpush1.msra.mxu0 0.0
    %143 = vmatprep.subr.mxu0 0.0
    %144 = vmatpush1.msra.mxu0 0.0
    %145 = vmatprep.subr.mxu0 0.0
    %146 = vmatpush1.msra.mxu0 0.0
    %147 = vmatprep.subr.mxu0 0.0
    %148 = vmatpush1.msra.mxu0 0.0
    %149 = vmatprep.subr.mxu0 0.0
    %150 = vmatpush1.msra.mxu0 0.0
    %151 = vmatprep.subr.mxu0 0.0
    %152 = vmatpush1.msra.mxu0 0.0
    %153 = vmatprep.subr.mxu0 0.0
    %154 = vmatpush1.msra.mxu0 0.0
    %155 = vmatprep.subr.mxu0 0.0
    %156 = vmatpush1.msra.mxu0 0.0
    %157 = vmatprep.mubr.f32.mxu0 0.0
    %158 = vmatmul.mubr.f32.gmra.mrb[0].mxu0 %v88
    %v159 = vpop.f32.mrb[0].mxu0
    %v160 = vadd.f32 %v84, %v159
    %v161 = vpop.f32.mrb[0].mxu0
    %162 = vmatprep.mubr.f32.mxu0 0.0
    %163 = vmatmul.mubr.f32.gmra.mrb[0].mxu0 %v91
    %v164 = vpop.f32.mrb[0].mxu0
    %v165 = vadd.f32 %v84, %v164
    %v166 = vpop.f32.mrb[0].mxu0
    %167 = vdwg.mxu0
    %v168 = vmax.f32 %v160, 0.0
    %v169 = vmax.f32 %v165, 0.0
    %v170 = vld [vmem:[%s3] sm:$0xff]
    %v171 = vld [vmem:[%s3 + $0x8] sm:$0xff]
    %v172 = vld [vmem:[%s3 + $0x10] sm:$0xff]
    %v173 = vld [vmem:[%s3 + $0x18] sm:$0xff]
    %v174 = vld [vmem:[%s3 + $0x20] sm:$0xff]
    %v175 = vld [vmem:[%s3 + $0x28] sm:$0xff]
    %v176 = vld [vmem:[%s3 + $0x30] sm:$0xff]
    %v177 = vld [vmem:[%s3 + $0x38] sm:$0xff]
    %v178 = vld [vmem:[%s4] sm:$0x1]
    %v180 = vlaneseq
    %v181 = vshrl.u32 %v180, 7
    %v182 = vsub.s32 0, %v181
    %v183 = vrot.slane %v178, %v182
    %vm185 = vcmask 523264
    %v187 = vsel %vm185, %v168, 0
    %v190 = vsel %vm185, %v169, 0
    %192 = vmatprep.subr.mxu0 0.0
    %193 = vmatpush1.msra.mxu0 %v170
    %194 = vmatprep.subr.mxu0 0.0
    %195 = vmatpush1.msra.mxu0 %v171
    %196 = vmatprep.subr.mxu0 0.0
    %197 = vmatpush1.msra.mxu0 %v172
    %198 = vmatprep.subr.mxu0 0.0
    %199 = vmatpush1.msra.mxu0 %v173
    %200 = vmatprep.subr.mxu0 0.0
    %201 = vmatpush1.msra.mxu0 %v174
    %202 = vmatprep.subr.mxu0 0.0
    %203 = vmatpush1.msra.mxu0 %v175
    %204 = vmatprep.subr.mxu0 0.0
    %205 = vmatpush1.msra.mxu0 %v176
    %206 = vmatprep.subr.mxu0 0.0
    %207 = vmatpush1.msra.mxu0 %v177
    %208 = vmatprep.subr.mxu0 0.0
    %209 = vmatpush1.msra.mxu0 0.0
    %210 = vmatprep.subr.mxu0 0.0
    %211 = vmatpush1.msra.mxu0 0.0
    %212 = vmatprep.subr.mxu0 0.0
    %213 = vmatpush1.msra.mxu0 0.0
    %214 = vmatprep.subr.mxu0 0.0
    %215 = vmatpush1.msra.mxu0 0.0
    %216 = vmatprep.subr.mxu0 0.0
    %217 = vmatpush1.msra.mxu0 0.0
    %218 = vmatprep.subr.mxu0 0.0
    %219 = vmatpush1.msra.mxu0 0.0
    %220 = vmatprep.subr.mxu0 0.0
    %221 = vmatpush1.msra.mxu0 0.0
    %222 = vmatprep.subr.mxu0 0.0
    %223 = vmatpush1.msra.mxu0 0.0
    %224 = vmatprep.subr.mxu0 0.0
    %225 = vmatpush1.msra.mxu0 0.0
    %226 = vmatprep.subr.mxu0 0.0
    %227 = vmatpush1.msra.mxu0 0.0
    %228 = vmatprep.subr.mxu0 0.0
    %229 = vmatpush1.msra.mxu0 0.0
    %230 = vmatprep.subr.mxu0 0.0
    %231 = vmatpush1.msra.mxu0 0.0
    %232 = vmatprep.subr.mxu0 0.0
    %233 = vmatpush1.msra.mxu0 0.0
    %234 = vmatprep.subr.mxu0 0.0
    %235 = vmatpush1.msra.mxu0 0.0
    %236 = vmatprep.subr.mxu0 0.0
    %237 = vmatpush1.msra.mxu0 0.0
    %238 = vmatprep.subr.mxu0 0.0
    %239 = vmatpush1.msra.mxu0 0.0
    %240 = vmatprep.subr.mxu0 0.0
    %241 = vmatpush1.msra.mxu0 0.0
    %242 = vmatprep.subr.mxu0 0.0
    %243 = vmatpush1.msra.mxu0 0.0
    %244 = vmatprep.subr.mxu0 0.0
    %245 = vmatpush1.msra.mxu0 0.0
    %246 = vmatprep.subr.mxu0 0.0
    %247 = vmatpush1.msra.mxu0 0.0
    %248 = vmatprep.subr.mxu0 0.0
    %249 = vmatpush1.msra.mxu0 0.0
    %250 = vmatprep.subr.mxu0 0.0
    %251 = vmatpush1.msra.mxu0 0.0
    %252 = vmatprep.subr.mxu0 0.0
    %253 = vmatpush1.msra.mxu0 0.0
    %254 = vmatprep.subr.mxu0 0.0
    %255 = vmatpush1.msra.mxu0 0.0
    %256 = vmatprep.mubr.f32.mxu0 0.0
    %257 = vmatmul.mubr.f32.gmra.mrb[0].mxu0 %v187
    %v258 = vpop.f32.mrb[0].mxu0
    %v259 = vadd.f32 %v183, %v258
    %v260 = vpop.f32.mrb[0].mxu0
    %261 = vmatprep.mubr.f32.mxu0 0.0
    %262 = vmatmul.mubr.f32.gmra.mrb[0].mxu0 %v190
    %v263 = vpop.f32.mrb[0].mxu0
    %v264 = vadd.f32 %v183, %v263
    %v265 = vpop.f32.mrb[0].mxu0
    %266 = vdwg.mxu0
    %v267 = vld [vmem:[#allocation4] sm:$0xff]
    %v268 = vld [vmem:[#allocation4 + $0x8] sm:$0xff]
    %v269 = vld [vmem:[#allocation4 + $0x10] sm:$0xff]
    %v270 = vld [vmem:[#allocation4 + $0x18] sm:$0xff]
    %v271 = vld [vmem:[%s6] sm:$0x1]
    %v273 = vlaneseq
    %v274 = vshrl.u32 %v273, 7
    %v275 = vsub.s32 0, %v274
    %v276 = vrot.slane %v271, %v275
    %v278 = vsel %vm86, 0.0, 0
    %280 = vmatprep.subr.mxu0 0.0
    %281 = vmatpush1.msra.mxu0 %v267
    %282 = vmatprep.subr.mxu0 0.0
    %283 = vmatpush1.msra.mxu0 %v268
    %284 = vmatprep.subr.mxu0 0.0
    %285 = vmatpush1.msra.mxu0 %v269
    %286 = vmatprep.subr.mxu0 0.0
    %287 = vmatpush1.msra.mxu0 %v270
    %288 = vmatprep.subr.mxu0 0.0
    %289 = vmatpush1.msra.mxu0 0.0
    %290 = vmatprep.subr.mxu0 0.0
    %291 = vmatpush1.msra.mxu0 0.0
    %292 = vmatprep.subr.mxu0 0.0
    %293 = vmatpush1.msra.mxu0 0.0
    %294 = vmatprep.subr.mxu0 0.0
    %295 = vmatpush1.msra.mxu0 0.0
    %296 = vmatprep.subr.mxu0 0.0
    %297 = vmatpush1.msra.mxu0 0.0
    %298 = vmatprep.subr.mxu0 0.0
    %299 = vmatpush1.msra.mxu0 0.0
    %300 = vmatprep.subr.mxu0 0.0
    %301 = vmatpush1.msra.mxu0 0.0
    %302 = vmatprep.subr.mxu0 0.0
    %303 = vmatpush1.msra.mxu0 0.0
    %304 = vmatprep.subr.mxu0 0.0
    %305 = vmatpush1.msra.mxu0 0.0
    %306 = vmatprep.subr.mxu0 0.0
    %307 = vmatpush1.msra.mxu0 0.0
    %308 = vmatprep.subr.mxu0 0.0
    %309 = vmatpush1.msra.mxu0 0.0
    %310 = vmatprep.subr.mxu0 0.0
    %311 = vmatpush1.msra.mxu0 0.0
    %312 = vmatprep.subr.mxu0 0.0
    %313 = vmatpush1.msra.mxu0 0.0
    %314 = vmatprep.subr.mxu0 0.0
    %315 = vmatpush1.msra.mxu0 0.0
    %316 = vmatprep.subr.mxu0 0.0
    %317 = vmatpush1.msra.mxu0 0.0
    %318 = vmatprep.subr.mxu0 0.0
    %319 = vmatpush1.msra.mxu0 0.0
    %320 = vmatprep.subr.mxu0 0.0
    %321 = vmatpush1.msra.mxu0 0.0
    %322 = vmatprep.subr.mxu0 0.0
    %323 = vmatpush1.msra.mxu0 0.0
    %324 = vmatprep.subr.mxu0 0.0
    %325 = vmatpush1.msra.mxu0 0.0
    %326 = vmatprep.subr.mxu0 0.0
    %327 = vmatpush1.msra.mxu0 0.0
    %328 = vmatprep.subr.mxu0 0.0
    %329 = vmatpush1.msra.mxu0 0.0
    %330 = vmatprep.subr.mxu0 0.0
    %331 = vmatpush1.msra.mxu0 0.0
    %332 = vmatprep.subr.mxu0 0.0
    %333 = vmatpush1.msra.mxu0 0.0
    %334 = vmatprep.subr.mxu0 0.0
    %335 = vmatpush1.msra.mxu0 0.0
    %336 = vmatprep.subr.mxu0 0.0
    %337 = vmatpush1.msra.mxu0 0.0
    %338 = vmatprep.subr.mxu0 0.0
    %339 = vmatpush1.msra.mxu0 0.0
    %340 = vmatprep.subr.mxu0 0.0
    %341 = vmatpush1.msra.mxu0 0.0
    %342 = vmatprep.subr.mxu0 0.0
    %343 = vmatpush1.msra.mxu0 0.0
    %344 = vmatprep.mubr.f32.mxu0 0.0
    %345 = vmatmul.mubr.f32.gmra.mrb[0].mxu0 %v278
    %v346 = vpop.f32.mrb[0].mxu0
    %v347 = vadd.f32 0.0, %v346
    %v348 = vpop.f32.mrb[0].mxu0
    %349 = vdwg.mxu0
    %v350 = vadd.f32 %v259, %v347
    %v351 = vxor.u32 %v350, 2147483648
    %v352 = vmul.f32 %v351, 1.442695
    %v353 = vpow.pop %v352
    %v354 = vadd.f32 %v353, 1.0
    %v355 = vrcp.pop %v354
    %v356 = vmul.f32 1.0, %v355
    %357 = vrot.lane.b32.xlu0 %v276, 64
    %v358 = vpop.permute.xlu0 %357
    %v360 = vadd.f32 %v347, %v358
    %362 = vrot.lane.b32.xlu0 %v360, 64
    %v363 = vpop.permute.xlu0 %362
    %v365 = vmul.f32 %v356, %v363
    %367 = vrot.lane.b32.xlu0 %v365, 64
    %v368 = vpop.permute.xlu0 %367
    %v370 = vadd.f32 %v259, %v368
    %v371 = vtanh.pop %v370
    %v372 = vsub.f32 0.0, %v371
    %374 = vrot.lane.b32.xlu0 %v372, 96
    %v375 = vpop.permute.xlu0 %374
    %v377 = vmul.f32 %v356, %v375
    %379 = vrot.lane.b32.xlu0 %v377, 32
    %v380 = vpop.permute.xlu0 %379
    %v382 = vadd.f32 %v371, %v380
    %384 = vrot.lane.b32.xlu0 %v382, 64
    %v385 = vpop.permute.xlu0 %384
    %v386 = vsel %vm86, %v385, 0
    %388 = vmatprep.subr.mxu0 0.0
    %389 = vmatpush1.msra.mxu0 %v267
    %390 = vmatprep.subr.mxu0 0.0
    %391 = vmatpush1.msra.mxu0 %v268
    %392 = vmatprep.subr.mxu0 0.0
    %393 = vmatpush1.msra.mxu0 %v269
    %394 = vmatprep.subr.mxu0 0.0
    %395 = vmatpush1.msra.mxu0 %v270
    %396 = vmatprep.subr.mxu0 0.0
    %397 = vmatpush1.msra.mxu0 0.0
    %398 = vmatprep.subr.mxu0 0.0
    %399 = vmatpush1.msra.mxu0 0.0
    %400 = vmatprep.subr.mxu0 0.0
    %401 = vmatpush1.msra.mxu0 0.0
    %402 = vmatprep.subr.mxu0 0.0
    %403 = vmatpush1.msra.mxu0 0.0
    %404 = vmatprep.subr.mxu0 0.0
    %405 = vmatpush1.msra.mxu0 0.0
    %406 = vmatprep.subr.mxu0 0.0
    %407 = vmatpush1.msra.mxu0 0.0
    %408 = vmatprep.subr.mxu0 0.0
    %409 = vmatpush1.msra.mxu0 0.0
    %410 = vmatprep.subr.mxu0 0.0
    %411 = vmatpush1.msra.mxu0 0.0
    %412 = vmatprep.subr.mxu0 0.0
    %413 = vmatpush1.msra.mxu0 0.0
    %414 = vmatprep.subr.mxu0 0.0
    %415 = vmatpush1.msra.mxu0 0.0
    %416 = vmatprep.subr.mxu0 0.0
    %417 = vmatpush1.msra.mxu0 0.0
    %418 = vmatprep.subr.mxu0 0.0
    %419 = vmatpush1.msra.mxu0 0.0
    %420 = vmatprep.subr.mxu0 0.0
    %421 = vmatpush1.msra.mxu0 0.0
    %422 = vmatprep.subr.mxu0 0.0
    %423 = vmatpush1.msra.mxu0 0.0
    %424 = vmatprep.subr.mxu0 0.0
    %425 = vmatpush1.msra.mxu0 0.0
    %426 = vmatprep.subr.mxu0 0.0
    %427 = vmatpush1.msra.mxu0 0.0
    %428 = vmatprep.subr.mxu0 0.0
    %429 = vmatpush1.msra.mxu0 0.0
    %430 = vmatprep.subr.mxu0 0.0
    %431 = vmatpush1.msra.mxu0 0.0
    %432 = vmatprep.subr.mxu0 0.0
    %433 = vmatpush1.msra.mxu0 0.0
    %434 = vmatprep.subr.mxu0 0.0
    %435 = vmatpush1.msra.mxu0 0.0
    %436 = vmatprep.subr.mxu0 0.0
    %437 = vmatpush1.msra.mxu0 0.0
    %438 = vmatprep.subr.mxu0 0.0
    %439 = vmatpush1.msra.mxu0 0.0
    %440 = vmatprep.subr.mxu0 0.0
    %441 = vmatpush1.msra.mxu0 0.0
    %442 = vmatprep.subr.mxu0 0.0
    %443 = vmatpush1.msra.mxu0 0.0
    %444 = vmatprep.subr.mxu0 0.0
    %445 = vmatpush1.msra.mxu0 0.0
    %446 = vmatprep.subr.mxu0 0.0
    %447 = vmatpush1.msra.mxu0 0.0
    %448 = vmatprep.subr.mxu0 0.0
    %449 = vmatpush1.msra.mxu0 0.0
    %450 = vmatprep.subr.mxu0 0.0
    %451 = vmatpush1.msra.mxu0 0.0
    %452 = vmatprep.mubr.f32.mxu0 0.0
    %453 = vmatmul.mubr.f32.gmra.mrb[0].mxu0 %v386
    %v454 = vpop.f32.mrb[0].mxu0
    %v455 = vadd.f32 0.0, %v454
    %v456 = vpop.f32.mrb[0].mxu0
    %457 = vdwg.mxu0
    %v459 = vrot.slane %v455, 6
    %v461 = vadd.f32 %v259, %v459
    %v462 = vxor.u32 %v461, 2147483648
    %v463 = vmul.f32 %v462, 1.442695
    %v464 = vpow.pop %v463
    %v465 = vadd.f32 %v464, 1.0
    %v466 = vrcp.pop %v465
    %v467 = vmul.f32 1.0, %v466
    %v468 = vadd.f32 %v455, %v358
    %v470 = vrot.slane %v468, 6
    %471 = vrot.lane.b32.xlu0 %v470, 64
    %v472 = vpop.permute.xlu0 %471
    %v474 = vmul.f32 %v467, %v472
    %476 = vrot.lane.b32.xlu0 %v474, 64
    %v477 = vpop.permute.xlu0 %476
    %v479 = vadd.f32 %v259, %v477
    %v480 = vtanh.pop %v479
    %v482 = vrot.slane %v480, 2
    %v484 = vsub.f32 %v382, %v482
    %v486 = vrot.slane %v484, 6
    %487 = vrot.lane.b32.xlu0 %v486, 96
    %v488 = vpop.permute.xlu0 %487
    %v490 = vmul.f32 %v467, %v488
    %492 = vrot.lane.b32.xlu0 %v490, 32
    %v493 = vpop.permute.xlu0 %492
    %v495 = vadd.f32 %v480, %v493
    %v497 = vrot.slane %v495, 2
    %498 = vrot.lane.b32.xlu0 %v497, 64
    %v499 = vpop.permute.xlu0 %498
    %v500 = vsel %vm86, %v499, 0
    %502 = vmatprep.subr.mxu0 0.0
    %503 = vmatpush1.msra.mxu0 %v267
    %504 = vmatprep.subr.mxu0 0.0
    %505 = vmatpush1.msra.mxu0 %v268
    %506 = vmatprep.subr.mxu0 0.0
    %507 = vmatpush1.msra.mxu0 %v269
    %508 = vmatprep.subr.mxu0 0.0
    %509 = vmatpush1.msra.mxu0 %v270
    %510 = vmatprep.subr.mxu0 0.0
    %511 = vmatpush1.msra.mxu0 0.0
    %512 = vmatprep.subr.mxu0 0.0
    %513 = vmatpush1.msra.mxu0 0.0
    %514 = vmatprep.subr.mxu0 0.0
    %515 = vmatpush1.msra.mxu0 0.0
    %516 = vmatprep.subr.mxu0 0.0
    %517 = vmatpush1.msra.mxu0 0.0
    %518 = vmatprep.subr.mxu0 0.0
    %519 = vmatpush1.msra.mxu0 0.0
    %520 = vmatprep.subr.mxu0 0.0
    %521 = vmatpush1.msra.mxu0 0.0
    %522 = vmatprep.subr.mxu0 0.0
    %523 = vmatpush1.msra.mxu0 0.0
    %524 = vmatprep.subr.mxu0 0.0
    %525 = vmatpush1.msra.mxu0 0.0
    %526 = vmatprep.subr.mxu0 0.0
    %527 = vmatpush1.msra.mxu0 0.0
    %528 = vmatprep.subr.mxu0 0.0
    %529 = vmatpush1.msra.mxu0 0.0
    %530 = vmatprep.subr.mxu0 0.0
    %531 = vmatpush1.msra.mxu0 0.0
    %532 = vmatprep.subr.mxu0 0.0
    %533 = vmatpush1.msra.mxu0 0.0
    %534 = vmatprep.subr.mxu0 0.0
    %535 = vmatpush1.msra.mxu0 0.0
    %536 = vmatprep.subr.mxu0 0.0
    %537 = vmatpush1.msra.mxu0 0.0
    %538 = vmatprep.subr.mxu0 0.0
    %539 = vmatpush1.msra.mxu0 0.0
    %540 = vmatprep.subr.mxu0 0.0
    %541 = vmatpush1.msra.mxu0 0.0
    %542 = vmatprep.subr.mxu0 0.0
    %543 = vmatpush1.msra.mxu0 0.0
    %544 = vmatprep.subr.mxu0 0.0
    %545 = vmatpush1.msra.mxu0 0.0
    %546 = vmatprep.subr.mxu0 0.0
    %547 = vmatpush1.msra.mxu0 0.0
    %548 = vmatprep.subr.mxu0 0.0
    %549 = vmatpush1.msra.mxu0 0.0
    %550 = vmatprep.subr.mxu0 0.0
    %551 = vmatpush1.msra.mxu0 0.0
    %552 = vmatprep.subr.mxu0 0.0
    %553 = vmatpush1.msra.mxu0 0.0
    %554 = vmatprep.subr.mxu0 0.0
    %555 = vmatpush1.msra.mxu0 0.0
    %556 = vmatprep.subr.mxu0 0.0
    %557 = vmatpush1.msra.mxu0 0.0
    %558 = vmatprep.subr.mxu0 0.0
    %559 = vmatpush1.msra.mxu0 0.0
    %560 = vmatprep.subr.mxu0 0.0
    %561 = vmatpush1.msra.mxu0 0.0
    %562 = vmatprep.subr.mxu0 0.0
    %563 = vmatpush1.msra.mxu0 0.0
    %564 = vmatprep.subr.mxu0 0.0
    %565 = vmatpush1.msra.mxu0 0.0
    %566 = vmatprep.mubr.f32.mxu0 0.0
    %567 = vmatmul.mubr.f32.gmra.mrb[0].mxu0 %v500
    %v568 = vpop.f32.mrb[0].mxu0
    %v569 = vadd.f32 0.0, %v568
    %v570 = vpop.f32.mrb[0].mxu0
    %571 = vdwg.mxu0
    %v573 = vrot.slane %v569, 4
    %v575 = vadd.f32 %v259, %v573
    %v576 = vxor.u32 %v575, 2147483648
    %v577 = vmul.f32 %v576, 1.442695
    %v578 = vpow.pop %v577
    %v579 = vadd.f32 %v578, 1.0
    %v580 = vrcp.pop %v579
    %v581 = vmul.f32 1.0, %v580
    %v582 = vadd.f32 %v569, %v358
    %v584 = vrot.slane %v582, 4
    %585 = vrot.lane.b32.xlu0 %v584, 64
    %v586 = vpop.permute.xlu0 %585
    %v588 = vmul.f32 %v581, %v586
    %590 = vrot.lane.b32.xlu0 %v588, 64
    %v591 = vpop.permute.xlu0 %590
    %v593 = vadd.f32 %v259, %v591
    %v594 = vtanh.pop %v593
    %v596 = vrot.slane %v594, 2
    %v598 = vsub.f32 %v495, %v596
    %v600 = vrot.slane %v598, 6
    %601 = vrot.lane.b32.xlu0 %v600, 96
    %v602 = vpop.permute.xlu0 %601
    %v604 = vmul.f32 %v581, %v602
    %606 = vrot.lane.b32.xlu0 %v604, 32
    %v607 = vpop.permute.xlu0 %606
    %v609 = vadd.f32 %v594, %v607
    %v611 = vrot.slane %v609, 4
    %612 = vrot.lane.b32.xlu0 %v611, 64
    %v613 = vpop.permute.xlu0 %612
    %v614 = vsel %vm86, %v613, 0
    %616 = vmatprep.subr.mxu0 0.0
    %617 = vmatpush1.msra.mxu0 %v267
    %618 = vmatprep.subr.mxu0 0.0
    %619 = vmatpush1.msra.mxu0 %v268
    %620 = vmatprep.subr.mxu0 0.0
    %621 = vmatpush1.msra.mxu0 %v269
    %622 = vmatprep.subr.mxu0 0.0
    %623 = vmatpush1.msra.mxu0 %v270
    %624 = vmatprep.subr.mxu0 0.0
    %625 = vmatpush1.msra.mxu0 0.0
    %626 = vmatprep.subr.mxu0 0.0
    %627 = vmatpush1.msra.mxu0 0.0
    %628 = vmatprep.subr.mxu0 0.0
    %629 = vmatpush1.msra.mxu0 0.0
    %630 = vmatprep.subr.mxu0 0.0
    %631 = vmatpush1.msra.mxu0 0.0
    %632 = vmatprep.subr.mxu0 0.0
    %633 = vmatpush1.msra.mxu0 0.0
    %634 = vmatprep.subr.mxu0 0.0
    %635 = vmatpush1.msra.mxu0 0.0
    %636 = vmatprep.subr.mxu0 0.0
    %637 = vmatpush1.msra.mxu0 0.0
    %638 = vmatprep.subr.mxu0 0.0
    %639 = vmatpush1.msra.mxu0 0.0
    %640 = vmatprep.subr.mxu0 0.0
    %641 = vmatpush1.msra.mxu0 0.0
    %642 = vmatprep.subr.mxu0 0.0
    %643 = vmatpush1.msra.mxu0 0.0
    %644 = vmatprep.subr.mxu0 0.0
    %645 = vmatpush1.msra.mxu0 0.0
    %646 = vmatprep.subr.mxu0 0.0
    %647 = vmatpush1.msra.mxu0 0.0
    %648 = vmatprep.subr.mxu0 0.0
    %649 = vmatpush1.msra.mxu0 0.0
    %650 = vmatprep.subr.mxu0 0.0
    %651 = vmatpush1.msra.mxu0 0.0
    %652 = vmatprep.subr.mxu0 0.0
    %653 = vmatpush1.msra.mxu0 0.0
    %654 = vmatprep.subr.mxu0 0.0
    %655 = vmatpush1.msra.mxu0 0.0
    %656 = vmatprep.subr.mxu0 0.0
    %657 = vmatpush1.msra.mxu0 0.0
    %658 = vmatprep.subr.mxu0 0.0
    %659 = vmatpush1.msra.mxu0 0.0
    %660 = vmatprep.subr.mxu0 0.0
    %661 = vmatpush1.msra.mxu0 0.0
    %662 = vmatprep.subr.mxu0 0.0
    %663 = vmatpush1.msra.mxu0 0.0
    %664 = vmatprep.subr.mxu0 0.0
    %665 = vmatpush1.msra.mxu0 0.0
    %666 = vmatprep.subr.mxu0 0.0
    %667 = vmatpush1.msra.mxu0 0.0
    %668 = vmatprep.subr.mxu0 0.0
    %669 = vmatpush1.msra.mxu0 0.0
    %670 = vmatprep.subr.mxu0 0.0
    %671 = vmatpush1.msra.mxu0 0.0
    %672 = vmatprep.subr.mxu0 0.0
    %673 = vmatpush1.msra.mxu0 0.0
    %674 = vmatprep.subr.mxu0 0.0
    %675 = vmatpush1.msra.mxu0 0.0
    %676 = vmatprep.subr.mxu0 0.0
    %677 = vmatpush1.msra.mxu0 0.0
    %678 = vmatprep.subr.mxu0 0.0
    %679 = vmatpush1.msra.mxu0 0.0
    %680 = vmatprep.mubr.f32.mxu0 0.0
    %681 = vmatmul.mubr.f32.gmra.mrb[0].mxu0 %v614
    %v682 = vpop.f32.mrb[0].mxu0
    %v683 = vadd.f32 0.0, %v682
    %v684 = vpop.f32.mrb[0].mxu0
    %685 = vdwg.mxu0
    %v687 = vrot.slane %v683, 2
    %v689 = vadd.f32 %v259, %v687
    %v690 = vxor.u32 %v689, 2147483648
    %v691 = vmul.f32 %v690, 1.442695
    %v692 = vpow.pop %v691
    %v693 = vadd.f32 %v692, 1.0
    %v694 = vrcp.pop %v693
    %v695 = vmul.f32 1.0, %v694
    %v696 = vadd.f32 %v683, %v358
    %v698 = vrot.slane %v696, 2
    %699 = vrot.lane.b32.xlu0 %v698, 64
    %v700 = vpop.permute.xlu0 %699
    %v702 = vmul.f32 %v695, %v700
    %704 = vrot.lane.b32.xlu0 %v702, 64
    %v705 = vpop.permute.xlu0 %704
    %v707 = vadd.f32 %v259, %v705
    %v708 = vtanh.pop %v707
    %v710 = vrot.slane %v708, 2
    %v712 = vsub.f32 %v609, %v710
    %v714 = vrot.slane %v712, 6
    %715 = vrot.lane.b32.xlu0 %v714, 96
    %v716 = vpop.permute.xlu0 %715
    %v718 = vmul.f32 %v695, %v716
    %720 = vrot.lane.b32.xlu0 %v718, 32
    %v721 = vpop.permute.xlu0 %720
    %v723 = vadd.f32 %v708, %v721
    %v725 = vrot.slane %v723, 6
    %726 = vrot.lane.b32.xlu0 %v725, 64
    %v727 = vpop.permute.xlu0 %726
    %v728 = vsel %vm86, %v727, 0
    %730 = vmatprep.subr.mxu0 0.0
    %731 = vmatpush1.msra.mxu0 %v267
    %732 = vmatprep.subr.mxu0 0.0
    %733 = vmatpush1.msra.mxu0 %v268
    %734 = vmatprep.subr.mxu0 0.0
    %735 = vmatpush1.msra.mxu0 %v269
    %736 = vmatprep.subr.mxu0 0.0
    %737 = vmatpush1.msra.mxu0 %v270
    %738 = vmatprep.subr.mxu0 0.0
    %739 = vmatpush1.msra.mxu0 0.0
    %740 = vmatprep.subr.mxu0 0.0
    %741 = vmatpush1.msra.mxu0 0.0
    %742 = vmatprep.subr.mxu0 0.0
    %743 = vmatpush1.msra.mxu0 0.0
    %744 = vmatprep.subr.mxu0 0.0
    %745 = vmatpush1.msra.mxu0 0.0
    %746 = vmatprep.subr.mxu0 0.0
    %747 = vmatpush1.msra.mxu0 0.0
    %748 = vmatprep.subr.mxu0 0.0
    %749 = vmatpush1.msra.mxu0 0.0
    %750 = vmatprep.subr.mxu0 0.0
    %751 = vmatpush1.msra.mxu0 0.0
    %752 = vmatprep.subr.mxu0 0.0
    %753 = vmatpush1.msra.mxu0 0.0
    %754 = vmatprep.subr.mxu0 0.0
    %755 = vmatpush1.msra.mxu0 0.0
    %756 = vmatprep.subr.mxu0 0.0
    %757 = vmatpush1.msra.mxu0 0.0
    %758 = vmatprep.subr.mxu0 0.0
    %759 = vmatpush1.msra.mxu0 0.0
    %760 = vmatprep.subr.mxu0 0.0
    %761 = vmatpush1.msra.mxu0 0.0
    %762 = vmatprep.subr.mxu0 0.0
    %763 = vmatpush1.msra.mxu0 0.0
    %764 = vmatprep.subr.mxu0 0.0
    %765 = vmatpush1.msra.mxu0 0.0
    %766 = vmatprep.subr.mxu0 0.0
    %767 = vmatpush1.msra.mxu0 0.0
    %768 = vmatprep.subr.mxu0 0.0
    %769 = vmatpush1.msra.mxu0 0.0
    %770 = vmatprep.subr.mxu0 0.0
    %771 = vmatpush1.msra.mxu0 0.0
    %772 = vmatprep.subr.mxu0 0.0
    %773 = vmatpush1.msra.mxu0 0.0
    %774 = vmatprep.subr.mxu0 0.0
    %775 = vmatpush1.msra.mxu0 0.0
    %776 = vmatprep.subr.mxu0 0.0
    %777 = vmatpush1.msra.mxu0 0.0
    %778 = vmatprep.subr.mxu0 0.0
    %779 = vmatpush1.msra.mxu0 0.0
    %780 = vmatprep.subr.mxu0 0.0
    %781 = vmatpush1.msra.mxu0 0.0
    %782 = vmatprep.subr.mxu0 0.0
    %783 = vmatpush1.msra.mxu0 0.0
    %784 = vmatprep.subr.mxu0 0.0
    %785 = vmatpush1.msra.mxu0 0.0
    %786 = vmatprep.subr.mxu0 0.0
    %787 = vmatpush1.msra.mxu0 0.0
    %788 = vmatprep.subr.mxu0 0.0
    %789 = vmatpush1.msra.mxu0 0.0
    %790 = vmatprep.subr.mxu0 0.0
    %791 = vmatpush1.msra.mxu0 0.0
    %792 = vmatprep.subr.mxu0 0.0
    %793 = vmatpush1.msra.mxu0 0.0
    %794 = vmatprep.mubr.f32.mxu0 0.0
    %795 = vmatmul.mubr.f32.gmra.mrb[0].mxu0 %v728
    %v796 = vpop.f32.mrb[0].mxu0
    %v797 = vadd.f32 0.0, %v796
    %v798 = vpop.f32.mrb[0].mxu0
    %799 = vdwg.mxu0
    %v800 = vadd.f32 %v264, %v797
    %v801 = vxor.u32 %v800, 2147483648
    %v802 = vmul.f32 %v801, 1.442695
    %v803 = vpow.pop %v802
    %v804 = vadd.f32 %v803, 1.0
    %v805 = vrcp.pop %v804
    %v806 = vmul.f32 1.0, %v805
    %v807 = vadd.f32 %v797, %v358
    %809 = vrot.lane.b32.xlu0 %v807, 64
    %v810 = vpop.permute.xlu0 %809
    %v812 = vmul.f32 %v806, %v810
    %814 = vrot.lane.b32.xlu0 %v812, 64
    %v815 = vpop.permute.xlu0 %814
    %v817 = vadd.f32 %v264, %v815
    %v818 = vtanh.pop %v817
    %v820 = vrot.slane %v818, 2
    %v822 = vsub.f32 %v723, %v820
    %v824 = vrot.slane %v822, 6
    %825 = vrot.lane.b32.xlu0 %v824, 96
    %v826 = vpop.permute.xlu0 %825
    %v828 = vmul.f32 %v806, %v826
    %830 = vrot.lane.b32.xlu0 %v828, 32
    %v831 = vpop.permute.xlu0 %830
    %v833 = vadd.f32 %v818, %v831
    %835 = vrot.lane.b32.xlu0 %v833, 64
    %v836 = vpop.permute.xlu0 %835
    %v837 = vsel %vm86, %v836, 0
    %839 = vmatprep.subr.mxu0 0.0
    %840 = vmatpush1.msra.mxu0 %v267
    %841 = vmatprep.subr.mxu0 0.0
    %842 = vmatpush1.msra.mxu0 %v268
    %843 = vmatprep.subr.mxu0 0.0
    %844 = vmatpush1.msra.mxu0 %v269
    %845 = vmatprep.subr.mxu0 0.0
    %846 = vmatpush1.msra.mxu0 %v270
    %847 = vmatprep.subr.mxu0 0.0
    %848 = vmatpush1.msra.mxu0 0.0
    %849 = vmatprep.subr.mxu0 0.0
    %850 = vmatpush1.msra.mxu0 0.0
    %851 = vmatprep.subr.mxu0 0.0
    %852 = vmatpush1.msra.mxu0 0.0
    %853 = vmatprep.subr.mxu0 0.0
    %854 = vmatpush1.msra.mxu0 0.0
    %855 = vmatprep.subr.mxu0 0.0
    %856 = vmatpush1.msra.mxu0 0.0
    %857 = vmatprep.subr.mxu0 0.0
    %858 = vmatpush1.msra.mxu0 0.0
    %859 = vmatprep.subr.mxu0 0.0
    %860 = vmatpush1.msra.mxu0 0.0
    %861 = vmatprep.subr.mxu0 0.0
    %862 = vmatpush1.msra.mxu0 0.0
    %863 = vmatprep.subr.mxu0 0.0
    %864 = vmatpush1.msra.mxu0 0.0
    %865 = vmatprep.subr.mxu0 0.0
    %866 = vmatpush1.msra.mxu0 0.0
    %867 = vmatprep.subr.mxu0 0.0
    %868 = vmatpush1.msra.mxu0 0.0
    %869 = vmatprep.subr.mxu0 0.0
    %870 = vmatpush1.msra.mxu0 0.0
    %871 = vmatprep.subr.mxu0 0.0
    %872 = vmatpush1.msra.mxu0 0.0
    %873 = vmatprep.subr.mxu0 0.0
    %874 = vmatpush1.msra.mxu0 0.0
    %875 = vmatprep.subr.mxu0 0.0
    %876 = vmatpush1.msra.mxu0 0.0
    %877 = vmatprep.subr.mxu0 0.0
    %878 = vmatpush1.msra.mxu0 0.0
    %879 = vmatprep.subr.mxu0 0.0
    %880 = vmatpush1.msra.mxu0 0.0
    %881 = vmatprep.subr.mxu0 0.0
    %882 = vmatpush1.msra.mxu0 0.0
    %883 = vmatprep.subr.mxu0 0.0
    %884 = vmatpush1.msra.mxu0 0.0
    %885 = vmatprep.subr.mxu0 0.0
    %886 = vmatpush1.msra.mxu0 0.0
    %887 = vmatprep.subr.mxu0 0.0
    %888 = vmatpush1.msra.mxu0 0.0
    %889 = vmatprep.subr.mxu0 0.0
    %890 = vmatpush1.msra.mxu0 0.0
    %891 = vmatprep.subr.mxu0 0.0
    %892 = vmatpush1.msra.mxu0 0.0
    %893 = vmatprep.subr.mxu0 0.0
    %894 = vmatpush1.msra.mxu0 0.0
    %895 = vmatprep.subr.mxu0 0.0
    %896 = vmatpush1.msra.mxu0 0.0
    %897 = vmatprep.subr.mxu0 0.0
    %898 = vmatpush1.msra.mxu0 0.0
    %899 = vmatprep.subr.mxu0 0.0
    %900 = vmatpush1.msra.mxu0 0.0
    %901 = vmatprep.subr.mxu0 0.0
    %902 = vmatpush1.msra.mxu0 0.0
    %903 = vmatprep.mubr.f32.mxu0 0.0
    %904 = vmatmul.mubr.f32.gmra.mrb[0].mxu0 %v837
    %v905 = vpop.f32.mrb[0].mxu0
    %v906 = vadd.f32 0.0, %v905
    %v907 = vpop.f32.mrb[0].mxu0
    %908 = vdwg.mxu0
    %v910 = vrot.slane %v906, 6
    %v912 = vadd.f32 %v264, %v910
    %v913 = vxor.u32 %v912, 2147483648
    %v914 = vmul.f32 %v913, 1.442695
    %v915 = vpow.pop %v914
    %v916 = vadd.f32 %v915, 1.0
    %v917 = vrcp.pop %v916
    %v918 = vmul.f32 1.0, %v917
    %v919 = vadd.f32 %v906, %v358
    %v921 = vrot.slane %v919, 6
    %922 = vrot.lane.b32.xlu0 %v921, 64
    %v923 = vpop.permute.xlu0 %922
    %v925 = vmul.f32 %v918, %v923
    %927 = vrot.lane.b32.xlu0 %v925, 64
    %v928 = vpop.permute.xlu0 %927
    %v930 = vadd.f32 %v264, %v928
    %v931 = vtanh.pop %v930
    %v933 = vrot.slane %v931, 2
    %v935 = vsub.f32 %v833, %v933
    %v937 = vrot.slane %v935, 6
    %938 = vrot.lane.b32.xlu0 %v937, 96
    %v939 = vpop.permute.xlu0 %938
    %v941 = vmul.f32 %v918, %v939
    %943 = vrot.lane.b32.xlu0 %v941, 32
    %v944 = vpop.permute.xlu0 %943
    %v946 = vadd.f32 %v931, %v944
    %v948 = vrot.slane %v946, 2
    %949 = vrot.lane.b32.xlu0 %v948, 64
    %v950 = vpop.permute.xlu0 %949
    %v951 = vsel %vm86, %v950, 0
    %953 = vmatprep.subr.mxu0 0.0
    %954 = vmatpush1.msra.mxu0 %v267
    %955 = vmatprep.subr.mxu0 0.0
    %956 = vmatpush1.msra.mxu0 %v268
    %957 = vmatprep.subr.mxu0 0.0
    %958 = vmatpush1.msra.mxu0 %v269
    %959 = vmatprep.subr.mxu0 0.0
    %960 = vmatpush1.msra.mxu0 %v270
    %961 = vmatprep.subr.mxu0 0.0
    %962 = vmatpush1.msra.mxu0 0.0
    %963 = vmatprep.subr.mxu0 0.0
    %964 = vmatpush1.msra.mxu0 0.0
    %965 = vmatprep.subr.mxu0 0.0
    %966 = vmatpush1.msra.mxu0 0.0
    %967 = vmatprep.subr.mxu0 0.0
    %968 = vmatpush1.msra.mxu0 0.0
    %969 = vmatprep.subr.mxu0 0.0
    %970 = vmatpush1.msra.mxu0 0.0
    %971 = vmatprep.subr.mxu0 0.0
    %972 = vmatpush1.msra.mxu0 0.0
    %973 = vmatprep.subr.mxu0 0.0
    %974 = vmatpush1.msra.mxu0 0.0
    %975 = vmatprep.subr.mxu0 0.0
    %976 = vmatpush1.msra.mxu0 0.0
    %977 = vmatprep.subr.mxu0 0.0
    %978 = vmatpush1.msra.mxu0 0.0
    %979 = vmatprep.subr.mxu0 0.0
    %980 = vmatpush1.msra.mxu0 0.0
    %981 = vmatprep.subr.mxu0 0.0
    %982 = vmatpush1.msra.mxu0 0.0
    %983 = vmatprep.subr.mxu0 0.0
    %984 = vmatpush1.msra.mxu0 0.0
    %985 = vmatprep.subr.mxu0 0.0
    %986 = vmatpush1.msra.mxu0 0.0
    %987 = vmatprep.subr.mxu0 0.0
    %988 = vmatpush1.msra.mxu0 0.0
    %989 = vmatprep.subr.mxu0 0.0
    %990 = vmatpush1.msra.mxu0 0.0
    %991 = vmatprep.subr.mxu0 0.0
    %992 = vmatpush1.msra.mxu0 0.0
    %993 = vmatprep.subr.mxu0 0.0
    %994 = vmatpush1.msra.mxu0 0.0
    %995 = vmatprep.subr.mxu0 0.0
    %996 = vmatpush1.msra.mxu0 0.0
    %997 = vmatprep.subr.mxu0 0.0
    %998 = vmatpush1.msra.mxu0 0.0
    %999 = vmatprep.subr.mxu0 0.0
    %1000 = vmatpush1.msra.mxu0 0.0
    %1001 = vmatprep.subr.mxu0 0.0
    %1002 = vmatpush1.msra.mxu0 0.0
    %1003 = vmatprep.subr.mxu0 0.0
    %1004 = vmatpush1.msra.mxu0 0.0
    %1005 = vmatprep.subr.mxu0 0.0
    %1006 = vmatpush1.msra.mxu0 0.0
    %1007 = vmatprep.subr.mxu0 0.0
    %1008 = vmatpush1.msra.mxu0 0.0
    %1009 = vmatprep.subr.mxu0 0.0
    %1010 = vmatpush1.msra.mxu0 0.0
    %1011 = vmatprep.subr.mxu0 0.0
    %1012 = vmatpush1.msra.mxu0 0.0
    %1013 = vmatprep.subr.mxu0 0.0
    %1014 = vmatpush1.msra.mxu0 0.0
    %1015 = vmatprep.subr.mxu0 0.0
    %1016 = vmatpush1.msra.mxu0 0.0
    %1017 = vmatprep.mubr.f32.mxu0 0.0
    %1018 = vmatmul.mubr.f32.gmra.mrb[0].mxu0 %v951
    %v1019 = vpop.f32.mrb[0].mxu0
    %v1020 = vadd.f32 0.0, %v1019
    %v1021 = vpop.f32.mrb[0].mxu0
    %1022 = vdwg.mxu0
    %v1024 = vrot.slane %v1020, 4
    %v1026 = vadd.f32 %v264, %v1024
    %v1027 = vxor.u32 %v1026, 2147483648
    %v1028 = vmul.f32 %v1027, 1.442695
    %v1029 = vpow.pop %v1028
    %v1030 = vadd.f32 %v1029, 1.0
    %v1031 = vrcp.pop %v1030
    %v1032 = vmul.f32 1.0, %v1031
    %v1033 = vadd.f32 %v1020, %v358
    %v1035 = vrot.slane %v1033, 4
    %1036 = vrot.lane.b32.xlu0 %v1035, 64
    %v1037 = vpop.permute.xlu0 %1036
    %v1039 = vmul.f32 %v1032, %v1037
    %1041 = vrot.lane.b32.xlu0 %v1039, 64
    %v1042 = vpop.permute.xlu0 %1041
    %v1044 = vadd.f32 %v264, %v1042
    %v1045 = vtanh.pop %v1044
    %v1047 = vrot.slane %v1045, 2
    %v1049 = vsub.f32 %v946, %v1047
    %v1051 = vrot.slane %v1049, 6
    %1052 = vrot.lane.b32.xlu0 %v1051, 96
    %v1053 = vpop.permute.xlu0 %1052
    %v1055 = vmul.f32 %v1032, %v1053
    %1057 = vrot.lane.b32.xlu0 %v1055, 32
    %v1058 = vpop.permute.xlu0 %1057
    %v1060 = vadd.f32 %v1045, %v1058
    %v1062 = vrot.slane %v1060, 4
    %1063 = vrot.lane.b32.xlu0 %v1062, 64
    %v1064 = vpop.permute.xlu0 %1063
    %v1065 = vsel %vm86, %v1064, 0
    %1067 = vmatprep.subr.mxu0 0.0
    %1068 = vmatpush1.msra.mxu0 %v267
    %1069 = vmatprep.subr.mxu0 0.0
    %1070 = vmatpush1.msra.mxu0 %v268
    %1071 = vmatprep.subr.mxu0 0.0
    %1072 = vmatpush1.msra.mxu0 %v269
    %1073 = vmatprep.subr.mxu0 0.0
    %1074 = vmatpush1.msra.mxu0 %v270
    %1075 = vmatprep.subr.mxu0 0.0
    %1076 = vmatpush1.msra.mxu0 0.0
    %1077 = vmatprep.subr.mxu0 0.0
    %1078 = vmatpush1.msra.mxu0 0.0
    %1079 = vmatprep.subr.mxu0 0.0
    %1080 = vmatpush1.msra.mxu0 0.0
    %1081 = vmatprep.subr.mxu0 0.0
    %1082 = vmatpush1.msra.mxu0 0.0
    %1083 = vmatprep.subr.mxu0 0.0
    %1084 = vmatpush1.msra.mxu0 0.0
    %1085 = vmatprep.subr.mxu0 0.0
    %1086 = vmatpush1.msra.mxu0 0.0
    %1087 = vmatprep.subr.mxu0 0.0
    %1088 = vmatpush1.msra.mxu0 0.0
    %1089 = vmatprep.subr.mxu0 0.0
    %1090 = vmatpush1.msra.mxu0 0.0
    %1091 = vmatprep.subr.mxu0 0.0
    %1092 = vmatpush1.msra.mxu0 0.0
    %1093 = vmatprep.subr.mxu0 0.0
    %1094 = vmatpush1.msra.mxu0 0.0
    %1095 = vmatprep.subr.mxu0 0.0
    %1096 = vmatpush1.msra.mxu0 0.0
    %1097 = vmatprep.subr.mxu0 0.0
    %1098 = vmatpush1.msra.mxu0 0.0
    %1099 = vmatprep.subr.mxu0 0.0
    %1100 = vmatpush1.msra.mxu0 0.0
    %1101 = vmatprep.subr.mxu0 0.0
    %1102 = vmatpush1.msra.mxu0 0.0
    %1103 = vmatprep.subr.mxu0 0.0
    %1104 = vmatpush1.msra.mxu0 0.0
    %1105 = vmatprep.subr.mxu0 0.0
    %1106 = vmatpush1.msra.mxu0 0.0
    %1107 = vmatprep.subr.mxu0 0.0
    %1108 = vmatpush1.msra.mxu0 0.0
    %1109 = vmatprep.subr.mxu0 0.0
    %1110 = vmatpush1.msra.mxu0 0.0
    %1111 = vmatprep.subr.mxu0 0.0
    %1112 = vmatpush1.msra.mxu0 0.0
    %1113 = vmatprep.subr.mxu0 0.0
    %1114 = vmatpush1.msra.mxu0 0.0
    %1115 = vmatprep.subr.mxu0 0.0
    %1116 = vmatpush1.msra.mxu0 0.0
    %1117 = vmatprep.subr.mxu0 0.0
    %1118 = vmatpush1.msra.mxu0 0.0
    %1119 = vmatprep.subr.mxu0 0.0
    %1120 = vmatpush1.msra.mxu0 0.0
    %1121 = vmatprep.subr.mxu0 0.0
    %1122 = vmatpush1.msra.mxu0 0.0
    %1123 = vmatprep.subr.mxu0 0.0
    %1124 = vmatpush1.msra.mxu0 0.0
    %1125 = vmatprep.subr.mxu0 0.0
    %1126 = vmatpush1.msra.mxu0 0.0
    %1127 = vmatprep.subr.mxu0 0.0
    %1128 = vmatpush1.msra.mxu0 0.0
    %1129 = vmatprep.subr.mxu0 0.0
    %1130 = vmatpush1.msra.mxu0 0.0
    %1131 = vmatprep.mubr.f32.mxu0 0.0
    %1132 = vmatmul.mubr.f32.gmra.mrb[0].mxu0 %v1065
    %v1133 = vpop.f32.mrb[0].mxu0
    %v1134 = vadd.f32 0.0, %v1133
    %v1135 = vpop.f32.mrb[0].mxu0
    %1136 = vdwg.mxu0
    %v1138 = vrot.slane %v1134, 2
    %v1140 = vadd.f32 %v264, %v1138
    %v1141 = vxor.u32 %v1140, 2147483648
    %v1142 = vmul.f32 %v1141, 1.442695
    %v1143 = vpow.pop %v1142
    %v1144 = vadd.f32 %v1143, 1.0
    %v1145 = vrcp.pop %v1144
    %v1146 = vmul.f32 1.0, %v1145
    %v1147 = vadd.f32 %v1134, %v358
    %v1149 = vrot.slane %v1147, 2
    %1150 = vrot.lane.b32.xlu0 %v1149, 64
    %v1151 = vpop.permute.xlu0 %1150
    %v1153 = vmul.f32 %v1146, %v1151
    %1155 = vrot.lane.b32.xlu0 %v1153, 64
    %v1156 = vpop.permute.xlu0 %1155
    %v1158 = vadd.f32 %v264, %v1156
    %v1159 = vtanh.pop %v1158
    %v1161 = vrot.slane %v1159, 2
    %v1163 = vsub.f32 %v1060, %v1161
    %v1165 = vrot.slane %v1163, 6
    %1166 = vrot.lane.b32.xlu0 %v1165, 96
    %v1167 = vpop.permute.xlu0 %1166
    %v1169 = vmul.f32 %v1146, %v1167
    %1171 = vrot.lane.b32.xlu0 %v1169, 32
    %v1172 = vpop.permute.xlu0 %1171
    %v1174 = vadd.f32 %v1159, %v1172
    %vm1175 = vcmask 1041408
    %v1176 = vsel %vm1175, %v382, %v495
    %vm1177 = vcmask 1043456
    %v1178 = vsel %vm1177, %v1176, %v609
    %vm1179 = vcmask 1045504
    %v1180 = vsel %vm1179, %v1178, %v723
    %v1181 = vsel %vm1175, %v833, %v946
    %v1182 = vsel %vm1177, %v1181, %v1060
    %v1183 = vsel %vm1179, %v1182, %v1174
    %v1184 = vld [vmem:[#allocation6] sm:$0xff]
    %v1185 = vld [vmem:[#allocation6 + $0x8] sm:$0xff]
    %v1186 = vld [vmem:[#allocation6 + $0x10] sm:$0xff]
    %v1187 = vld [vmem:[#allocation6 + $0x18] sm:$0xff]
    %v1188 = vld [vmem:[%s8] sm:$0x1]
    %v1190 = vlaneseq
    %v1191 = vshrl.u32 %v1190, 7
    %v1192 = vsub.s32 0, %v1191
    %v1193 = vrot.slane %v1188, %v1192
    %1197 = vrot.lane.b32.xlu0 %v1180, 64
    %v1198 = vpop.permute.xlu0 %1197
    %1199 = vrot.lane.b32.xlu0 %v1183, 64
    %v1200 = vpop.permute.xlu0 %1199
    %v1201 = vsel %vm86, %v1198, 0
    %v1203 = vsel %vm86, %v1200, 0
    %1205 = vmatprep.subr.mxu0 0.0
    %1206 = vmatpush1.msra.mxu0 %v1184
    %1207 = vmatprep.subr.mxu0 0.0
    %1208 = vmatpush1.msra.mxu0 %v1185
    %1209 = vmatprep.subr.mxu0 0.0
    %1210 = vmatpush1.msra.mxu0 %v1186
    %1211 = vmatprep.subr.mxu0 0.0
    %1212 = vmatpush1.msra.mxu0 %v1187
    %1213 = vmatprep.subr.mxu0 0.0
    %1214 = vmatpush1.msra.mxu0 0.0
    %1215 = vmatprep.subr.mxu0 0.0
    %1216 = vmatpush1.msra.mxu0 0.0
    %1217 = vmatprep.subr.mxu0 0.0
    %1218 = vmatpush1.msra.mxu0 0.0
    %1219 = vmatprep.subr.mxu0 0.0
    %1220 = vmatpush1.msra.mxu0 0.0
    %1221 = vmatprep.subr.mxu0 0.0
    %1222 = vmatpush1.msra.mxu0 0.0
    %1223 = vmatprep.subr.mxu0 0.0
    %1224 = vmatpush1.msra.mxu0 0.0
    %1225 = vmatprep.subr.mxu0 0.0
    %1226 = vmatpush1.msra.mxu0 0.0
    %1227 = vmatprep.subr.mxu0 0.0
    %1228 = vmatpush1.msra.mxu0 0.0
    %1229 = vmatprep.subr.mxu0 0.0
    %1230 = vmatpush1.msra.mxu0 0.0
    %1231 = vmatprep.subr.mxu0 0.0
    %1232 = vmatpush1.msra.mxu0 0.0
    %1233 = vmatprep.subr.mxu0 0.0
    %1234 = vmatpush1.msra.mxu0 0.0
    %1235 = vmatprep.subr.mxu0 0.0
    %1236 = vmatpush1.msra.mxu0 0.0
    %1237 = vmatprep.subr.mxu0 0.0
    %1238 = vmatpush1.msra.mxu0 0.0
    %1239 = vmatprep.subr.mxu0 0.0
    %1240 = vmatpush1.msra.mxu0 0.0
    %1241 = vmatprep.subr.mxu0 0.0
    %1242 = vmatpush1.msra.mxu0 0.0
    %1243 = vmatprep.subr.mxu0 0.0
    %1244 = vmatpush1.msra.mxu0 0.0
    %1245 = vmatprep.subr.mxu0 0.0
    %1246 = vmatpush1.msra.mxu0 0.0
    %1247 = vmatprep.subr.mxu0 0.0
    %1248 = vmatpush1.msra.mxu0 0.0
    %1249 = vmatprep.subr.mxu0 0.0
    %1250 = vmatpush1.msra.mxu0 0.0
    %1251 = vmatprep.subr.mxu0 0.0
    %1252 = vmatpush1.msra.mxu0 0.0
    %1253 = vmatprep.subr.mxu0 0.0
    %1254 = vmatpush1.msra.mxu0 0.0
    %1255 = vmatprep.subr.mxu0 0.0
    %1256 = vmatpush1.msra.mxu0 0.0
    %1257 = vmatprep.subr.mxu0 0.0
    %1258 = vmatpush1.msra.mxu0 0.0
    %1259 = vmatprep.subr.mxu0 0.0
    %1260 = vmatpush1.msra.mxu0 0.0
    %1261 = vmatprep.subr.mxu0 0.0
    %1262 = vmatpush1.msra.mxu0 0.0
    %1263 = vmatprep.subr.mxu0 0.0
    %1264 = vmatpush1.msra.mxu0 0.0
    %1265 = vmatprep.subr.mxu0 0.0
    %1266 = vmatpush1.msra.mxu0 0.0
    %1267 = vmatprep.subr.mxu0 0.0
    %1268 = vmatpush1.msra.mxu0 0.0
    %1269 = vmatprep.mubr.f32.mxu0 0.0
    %1270 = vmatmul.mubr.f32.gmra.mrb[0].mxu0 %v1201
    %v1271 = vpop.f32.mrb[0].mxu0
    %v1272 = vadd.f32 %v1193, %v1271
    %v1273 = vpop.f32.mrb[0].mxu0
    %1274 = vmatprep.mubr.f32.mxu0 0.0
    %1275 = vmatmul.mubr.f32.gmra.mrb[0].mxu0 %v1203
    %v1276 = vpop.f32.mrb[0].mxu0
    %v1277 = vadd.f32 %v1193, %v1276
    %v1278 = vpop.f32.mrb[0].mxu0
    %1279 = vdwg.mxu0
    %1280 = vst.msk [vmem:[%s9] sm:$0xff] %vm86, %v1272
    %1281 = vst.msk [vmem:[%s9 + $0x8] sm:$0xff] %vm86, %v1277
    // Predicated region
    $region50: #{mmaid_forward.1} parent=1 // pred_check
      _
    $region51: #{mmaid_forward.1} parent=1 // pred_check_branch
      %1283 = sbr.rel (0) target = $region53
    $region52: #{mmaid_forward.1} parent=1 // pred_region
      _
    $region53: #{mmaid_forward.1} parent=1 // pred_fallthru
      _
    // Predicated region
    $region54: #{mmaid_forward.1} parent=1 // pred_check
      _
    $region55: #{mmaid_forward.1} parent=1 // pred_check_branch
      %1285 = sbr.rel (0) target = $region57
    $region56: #{mmaid_forward.1} parent=1 // pred_region
      _
    $region57: #{mmaid_forward.1} parent=1 // pred_fallthru
      _
    %1286 = vsyncpa [#allocation3], 1
    %1287 = vsyncpa [#allocation5], 1

</llo_original>
